<compile_context>
chip_gen: v7x
topology: tpu7x:2x2x1
jax: 0.10.0
libtpu: 0.0.40
codegen_flags: <defaults>
</compile_context>

<pallas_src>
import functools
import math

import jax
import jax.numpy as jnp
from jax.experimental import pallas as pl
from jax.experimental.pallas import tpu as pltpu

LN_EPS = 1e-5
VMEM_LIMIT = 48 * 1024 * 1024  # safely under v7x's 64 MiB physical VMEM


def _pick_tile(dim, cap, align):
    """Largest divisor of `dim` that is <= cap and a multiple of `align`, else full dim."""
    if dim <= cap:
        return dim
    t = (cap // align) * align
    while t >= align:
        if dim % t == 0:
            return t
        t -= align
    return dim


# ----------------------------- Pallas kernels ------------------------------ #

def _linear_kernel(x_ref, w_ref, b_ref, *rest, activation, has_residual):
    """Tiled y = act(x @ w + b) [+ residual]; K is the reduction grid axis (axis 2)."""
    if has_residual:
        res_ref, o_ref, acc_ref = rest
    else:
        o_ref, acc_ref = rest
        res_ref = None

    @pl.when(pl.program_id(2) == 0)
    def _():
        acc_ref[...] = jnp.zeros_like(acc_ref)

    # Matmul operands stay in their native dtype (bf16 at scale); f32 accumulation.
    acc_ref[...] += jnp.dot(x_ref[...], w_ref[...],
                            preferred_element_type=jnp.float32)

    @pl.when(pl.program_id(2) == pl.num_programs(2) - 1)
    def _():
        y = acc_ref[...] + b_ref[...].astype(jnp.float32)
        if activation == "gelu":
            y = jax.nn.gelu(y)          # GPT-2 tanh approximation
        elif activation == "tanh":
            y = jnp.tanh(y)
        if has_residual:
            y = y + res_ref[...].astype(jnp.float32)
        o_ref[...] = y.astype(o_ref.dtype)


def linear(x, w, b=None, activation="none", residual=None,
           tm_cap=256, tn_cap=512, tk_cap=512):
    M, K = x.shape
    Kw, N = w.shape
    assert K == Kw
    if b is None:
        b = jnp.zeros((N,), x.dtype)
    tm = _pick_tile(M, tm_cap, 8)
    tn = _pick_tile(N, tn_cap, 128)
    tk = _pick_tile(K, tk_cap, 128)
    grid = (M // tm, N // tn, K // tk)
    has_residual = residual is not None

    kernel = functools.partial(_linear_kernel, activation=activation,
                               has_residual=has_residual)
    in_specs = [pl.BlockSpec((tm, tk), lambda i, j, k: (i, k)),
                pl.BlockSpec((tk, tn), lambda i, j, k: (k, j)),
                pl.BlockSpec((1, tn), lambda i, j, k: (0, j))]
    args = [x, w, b.reshape(1, N)]
    if has_residual:
        in_specs.append(pl.BlockSpec((tm, tn), lambda i, j, k: (i, j)))
        args.append(residual)

    itemsize = x.dtype.itemsize
    flops = 2 * M * N * K
    transcendentals = M * N if activation in ("gelu", "tanh") else 0
    bytes_accessed = (M * K + K * N + M * N * (2 if has_residual else 1) + N) * itemsize

    return pl.pallas_call(
        kernel,
        grid=grid,
        in_specs=in_specs,
        out_specs=pl.BlockSpec((tm, tn), lambda i, j, k: (i, j)),
        out_shape=jax.ShapeDtypeStruct((M, N), x.dtype),
        scratch_shapes=[pltpu.VMEM((tm, tn), jnp.float32)],
        compiler_params=pltpu.CompilerParams(
            dimension_semantics=("parallel", "parallel", "arbitrary"),
            vmem_limit_bytes=VMEM_LIMIT),
        cost_estimate=pl.CostEstimate(flops=flops,
                                      transcendentals=transcendentals,
                                      bytes_accessed=bytes_accessed),
    )(*args)


def _lm_head_kernel(x_ref, w_ref, o_ref, acc_ref):
    """logits tile = x @ wte_tile.T ; wte tiled by vocab rows, never transposed in HBM."""
    @pl.when(pl.program_id(2) == 0)
    def _():
        acc_ref[...] = jnp.zeros_like(acc_ref)

    acc_ref[...] += jax.lax.dot_general(
        x_ref[...], w_ref[...],
        dimension_numbers=(((1,), (1,)), ((), ())),
        preferred_element_type=jnp.float32)

    @pl.when(pl.program_id(2) == pl.num_programs(2) - 1)
    def _():
        o_ref[...] = acc_ref[...].astype(o_ref.dtype)


def lm_head(x, wte, tm_cap=256, tv_cap=512, tk_cap=512):
    M, D = x.shape
    V, Dw = wte.shape
    assert D == Dw
    tm = _pick_tile(M, tm_cap, 8)
    tv = _pick_tile(V, tv_cap, 128)
    tk = _pick_tile(D, tk_cap, 128)
    grid = (M // tm, V // tv, D // tk)
    itemsize = x.dtype.itemsize
    return pl.pallas_call(
        _lm_head_kernel,
        grid=grid,
        in_specs=[pl.BlockSpec((tm, tk), lambda i, j, k: (i, k)),
                  pl.BlockSpec((tv, tk), lambda i, j, k: (j, k))],
        out_specs=pl.BlockSpec((tm, tv), lambda i, j, k: (i, j)),
        out_shape=jax.ShapeDtypeStruct((M, V), x.dtype),
        scratch_shapes=[pltpu.VMEM((tm, tv), jnp.float32)],
        compiler_params=pltpu.CompilerParams(
            dimension_semantics=("parallel", "parallel", "arbitrary"),
            vmem_limit_bytes=VMEM_LIMIT),
        cost_estimate=pl.CostEstimate(flops=2 * M * V * D, transcendentals=0,
                                      bytes_accessed=(M * D + V * D + M * V) * itemsize),
    )(x, wte)


def _layernorm_kernel(x_ref, g_ref, b_ref, a_ref, o_ref):
    x = x_ref[...].astype(jnp.float32)
    mu = jnp.mean(x, axis=-1, keepdims=True)
    var = jnp.mean(jnp.square(x - mu), axis=-1, keepdims=True)
    y = (x - mu) * jax.lax.rsqrt(var + LN_EPS)
    y = (y * g_ref[...].astype(jnp.float32)
         + b_ref[...].astype(jnp.float32)
         + a_ref[...].astype(jnp.float32))        # fused extra additive bias
    o_ref[...] = y.astype(o_ref.dtype)


def layernorm(x, g, b, extra=None, tm_cap=512):
    M, D = x.shape
    if extra is None:
        extra = jnp.zeros((1, D), x.dtype)
    else:
        extra = extra.reshape(1, D).astype(x.dtype)
    tm = _pick_tile(M, tm_cap, 8)
    grid = (M // tm,)
    return pl.pallas_call(
        _layernorm_kernel,
        grid=grid,
        in_specs=[pl.BlockSpec((tm, D), lambda i: (i, 0)),
                  pl.BlockSpec((1, D), lambda i: (0, 0)),
                  pl.BlockSpec((1, D), lambda i: (0, 0)),
                  pl.BlockSpec((1, D), lambda i: (0, 0))],
        out_specs=pl.BlockSpec((tm, D), lambda i: (i, 0)),
        out_shape=jax.ShapeDtypeStruct((M, D), x.dtype),
        compiler_params=pltpu.CompilerParams(dimension_semantics=("parallel",)),
    )(x, g.reshape(1, D), b.reshape(1, D), extra)


def _attention_kernel(q_ref, k_ref, v_ref, m_ref, o_ref, *, scale):
    """Causal multi-head self-attention for one batch element, all heads.

    q/k/v refs: (1, T, 1, H, Dh) slices of the packed qkv tensor.
    Output block is lane-dense (1, T, H*Dh) so it feeds w_o without a transpose.
    """
    T = q_ref.shape[1]
    H = q_ref.shape[3]
    Dh = q_ref.shape[4]

    q_all = q_ref[...][0, :, 0]          # (T, H, Dh)
    k_all = k_ref[...][0, :, 0]
    v_all = v_ref[...][0, :, 0]

    key_bias = (1.0 - m_ref[0].astype(jnp.float32)) * (-10000.0)     # (1, T), GPT-2 style
    row = jax.lax.broadcasted_iota(jnp.int32, (T, T), 0)
    col = jax.lax.broadcasted_iota(jnp.int32, (T, T), 1)
    causal = col <= row

    for h in range(H):                   # static unroll over heads
        q = q_all[:, h, :]               # (T, Dh)
        k = k_all[:, h, :]
        v = v_all[:, h, :]
        # s = q @ k.T without materializing a transpose
        s = jax.lax.dot_general(q, k, (((1,), (1,)), ((), ())),
                                preferred_element_type=jnp.float32) * scale
        s = jnp.where(causal, s + key_bias, -1e9)
        m = jnp.max(s, axis=-1, keepdims=True)
        p = jnp.exp(s - m)
        denom = jnp.sum(p, axis=-1, keepdims=True)
        p = (p * pl.reciprocal(denom, approx=True)).astype(v.dtype)
        o = jnp.dot(p, v, preferred_element_type=jnp.float32)        # (T, Dh)
        o_ref[0, :, h * Dh:(h + 1) * Dh] = o.astype(o_ref.dtype)


def attention(qkv, mask3, scale):
    """qkv: (B, T, 3, H, Dh), mask3: (B, 1, T) -> (B, T, H*Dh)."""
    B, T, _, H, Dh = qkv.shape
    D = H * Dh
    kernel = functools.partial(_attention_kernel, scale=scale)
    itemsize = qkv.dtype.itemsize
    return pl.pallas_call(
        kernel,
        grid=(B,),
        in_specs=[pl.BlockSpec((1, T, 1, H, Dh), lambda b: (b, 0, 0, 0, 0)),
                  pl.BlockSpec((1, T, 1, H, Dh), lambda b: (b, 0, 1, 0, 0)),
                  pl.BlockSpec((1, T, 1, H, Dh), lambda b: (b, 0, 2, 0, 0)),
                  pl.BlockSpec((1, 1, T), lambda b: (b, 0, 0))],
        out_specs=pl.BlockSpec((1, T, D), lambda b: (b, 0, 0)),
        out_shape=jax.ShapeDtypeStruct((B, T, D), qkv.dtype),
        compiler_params=pltpu.CompilerParams(
            dimension_semantics=("parallel",),
            vmem_limit_bytes=VMEM_LIMIT),
        cost_estimate=pl.CostEstimate(flops=4 * B * H * T * T * Dh,
                                      transcendentals=B * H * T * T,
                                      bytes_accessed=(4 * B * T * D + B * T) * itemsize),
    )(qkv, qkv, qkv, mask3)


# --------------------------- model (glue in JAX) --------------------------- #

def init_params(key, *, vocab, d, layers, max_pos, prefix_len):
    keys = jax.random.split(key, 8 + layers)

    def nrm(k, shape, s=0.02):
        return (jax.random.normal(k, shape) * s).astype(jnp.float32)

    params = {
        "wte": nrm(keys[0], (vocab, d)),
        "wpe": nrm(keys[1], (max_pos, d)),
        "ln_f_g": jnp.ones((d,), jnp.float32),
        "ln_f_b": jnp.zeros((d,), jnp.float32),
        # prefix-tuning params: nn.Parameter(randn(P, d) * 0.1), MLP d->2d->d
        "prefix_emb": (jax.random.normal(keys[2], (prefix_len, d)) * 0.1).astype(jnp.float32),
        "prefix_w1": nrm(keys[3], (d, 2 * d)),
        "prefix_b1": jnp.zeros((2 * d,), jnp.float32),
        "prefix_w2": nrm(keys[4], (2 * d, d)),
        "prefix_b2": jnp.zeros((d,), jnp.float32),
        "layers": [],
    }
    for i in range(layers):
        k = jax.random.split(keys[8 + i], 4)
        params["layers"].append({
            "ln1_g": jnp.ones((d,), jnp.float32), "ln1_b": jnp.zeros((d,), jnp.float32),
            "w_qkv": nrm(k[0], (d, 3 * d)), "b_qkv": jnp.zeros((3 * d,), jnp.float32),
            "w_o": nrm(k[1], (d, d)), "b_o": jnp.zeros((d,), jnp.float32),
            "ln2_g": jnp.ones((d,), jnp.float32), "ln2_b": jnp.zeros((d,), jnp.float32),
            "w_fc": nrm(k[2], (d, 4 * d)), "b_fc": jnp.zeros((4 * d,), jnp.float32),
            "w_proj": nrm(k[3], (4 * d, d)), "b_proj": jnp.zeros((d,), jnp.float32),
        })
    return params


def prefix_bias(params):
    """Prefix MLP on (P, D) rows is tiny -> plain JAX; result is a single (1, D) vector."""
    p = params["prefix_emb"]
    hmid = jnp.tanh(p @ params["prefix_w1"] + params["prefix_b1"])
    pinf = hmid @ params["prefix_w2"] + params["prefix_b2"]
    return jnp.mean(pinf, axis=0, keepdims=True) * 0.1               # (1, D)


def gpt2_last_hidden_state(params, input_ids, attention_mask, num_heads, extra_ln_bias):
    B, T = input_ids.shape
    D = params["wte"].shape[1]
    Dh = D // num_heads
    # embedding lookup (gather) stays in plain JAX (glue)
    h = jnp.take(params["wte"], input_ids, axis=0) + params["wpe"][:T][None, :, :]
    mask3 = attention_mask.astype(h.dtype).reshape(B, 1, T)
    scale = 1.0 / math.sqrt(Dh)

    h2d = h.reshape(B * T, D)
    for lyr in params["layers"]:
        # pre-LN attention block
        x = layernorm(h2d, lyr["ln1_g"], lyr["ln1_b"])
        qkv = linear(x, lyr["w_qkv"], lyr["b_qkv"])                  # (B*T, 3D)
        qkv = qkv.reshape(B, T, 3, num_heads, Dh)                    # free reshape
        attn = attention(qkv, mask3, scale)                          # (B, T, D), lane-dense
        h2d = linear(attn.reshape(B * T, D), lyr["w_o"], lyr["b_o"],
                     residual=h2d)                                   # fused residual add
        # pre-LN MLP block
        x = layernorm(h2d, lyr["ln2_g"], lyr["ln2_b"])
        ff = linear(x, lyr["w_fc"], lyr["b_fc"], activation="gelu")
        h2d = linear(ff, lyr["w_proj"], lyr["b_proj"], residual=h2d)

    # final LN with the prefix-influence vector fused into its epilogue
    h2d = layernorm(h2d, params["ln_f_g"], params["ln_f_b"], extra=extra_ln_bias)
    return h2d                                                        # (B*T, D)


def sonnet_forward(params, input_ids, attention_mask, num_heads, use_prefix=True):
    B, T = input_ids.shape
    V, D = params["wte"].shape
    if use_prefix:
        extra = prefix_bias(params)
    else:
        extra = jnp.zeros((1, D), params["wte"].dtype)
    h2d = gpt2_last_hidden_state(params, input_ids, attention_mask, num_heads, extra)
    # hidden_state_to_token: weight-tied projection (h @ wte.T) without materializing wte.T
    logits = lm_head(h2d, params["wte"])
    return logits.reshape(B, T, V)


# --------------------------------- main ------------------------------------ #

if __name__ == "__main__":
    B, T, D, H, L, V, P, MAXPOS = 2, 8, 32, 2, 2, 64, 4, 16

    key = jax.random.PRNGKey(0)
    pkey, ikey = jax.random.split(key)
    params = init_params(pkey, vocab=V, d=D, layers=L, max_pos=MAXPOS, prefix_len=P)

    input_ids = jax.random.randint(ikey, (B, T), 0, V, dtype=jnp.int32)
    attention_mask = jnp.ones((B, T), jnp.int32).at[1, T - 2:].set(0)  # pad tail of row 1

    fwd = jax.jit(functools.partial(sonnet_forward, num_heads=H, use_prefix=True))
    logits = fwd(params, input_ids, attention_mask)
    jax.block_until_ready(logits)

    assert logits.shape == (B, T, V), logits.shape
    assert bool(jnp.isfinite(logits).all())
    print("KERNEL_OK")
</pallas_src>

<mosaic_0001>
module attributes {stable_mosaic.version = 11 : i64} {
  func.func @_linear_kernel(%arg0: i32, %arg1: i32, %arg2: i32, %arg3: memref<16x32xf32, #tpu.memory_space<vmem>>, %arg4: memref<32x96xf32, #tpu.memory_space<vmem>>, %arg5: memref<1x96xf32, #tpu.memory_space<vmem>>, %arg6: memref<16x96xf32, #tpu.memory_space<vmem>>, %arg7: memref<16x96xf32, #tpu.memory_space<vmem>>) attributes {dimension_semantics = [#tpu.dimension_semantics<parallel>, #tpu.dimension_semantics<parallel>, #tpu.dimension_semantics<arbitrary>], iteration_bounds = array<i64: 1, 1, 1>, scalar_prefetch = 0 : i64, scratch_operands = 1 : i64, tpu.core_type = #tpu.core_type<tc>, window_params = [{transform_indices = @transform_0, window_bounds = array<i64: 16, 32>}, {transform_indices = @transform_1, window_bounds = array<i64: 32, 96>}, {transform_indices = @transform_2, window_bounds = array<i64: 1, 96>}, {transform_indices = @transform_3, window_bounds = array<i64: 16, 96>}]} {
    %c0_i32 = arith.constant 0 : i32
    %0 = arith.cmpi eq, %arg2, %c0_i32 : i32
    %1 = arith.extui %0 : i1 to i32
    %c0_i32_0 = arith.constant 0 : i32
    %2 = arith.cmpi ne, %1, %c0_i32_0 : i32
    scf.if %2 {
      %cst_10 = arith.constant 0.000000e+00 : f32
      %12 = vector.broadcast %cst_10 : f32 to vector<16x96xf32>
      %c0_11 = arith.constant 0 : index
      %c0_12 = arith.constant 0 : index
      %13 = vector.load %arg7[%c0_11, %c0_12] : memref<16x96xf32, #tpu.memory_space<vmem>>, vector<16x96xf32>
      tpu.vector_store %arg7[%c0_11, %c0_12], %12 {strides = array<i32>} : memref<16x96xf32, #tpu.memory_space<vmem>>, vector<16x96xf32>,
    } else {
    }
    %c0 = arith.constant 0 : index
    %c0_1 = arith.constant 0 : index
    %3 = vector.load %arg7[%c0, %c0_1] : memref<16x96xf32, #tpu.memory_space<vmem>>, vector<16x96xf32>
    %c0_2 = arith.constant 0 : index
    %c0_3 = arith.constant 0 : index
    %4 = vector.load %arg3[%c0_2, %c0_3] : memref<16x32xf32, #tpu.memory_space<vmem>>, vector<16x32xf32>
    %c0_4 = arith.constant 0 : index
    %c0_5 = arith.constant 0 : index
    %5 = vector.load %arg4[%c0_4, %c0_5] : memref<32x96xf32, #tpu.memory_space<vmem>>, vector<32x96xf32>
    %cst = arith.constant dense<0.000000e+00> : vector<16x96xf32>
    %6 = tpu.matmul %4, %5, %cst {dimension_numbers = #tpu.dot_dimension_numbers<[1], [0], [0], [1], [0, 0, 1, 1], [], []>} : vector<16x32xf32>, vector<32x96xf32>, vector<16x96xf32> -> vector<16x96xf32>
    %7 = arith.addf %3, %6 : vector<16x96xf32>
    %c0_6 = arith.constant 0 : index
    %c0_7 = arith.constant 0 : index
    %8 = vector.load %arg7[%c0_6, %c0_7] : memref<16x96xf32, #tpu.memory_space<vmem>>, vector<16x96xf32>
    tpu.vector_store %arg7[%c0_6, %c0_7], %7 {strides = array<i32>} : memref<16x96xf32, #tpu.memory_space<vmem>>, vector<16x96xf32>,
    %c0_i32_8 = arith.constant 0 : i32
    %9 = arith.cmpi eq, %arg2, %c0_i32_8 : i32
    %10 = arith.extui %9 : i1 to i32
    %c0_i32_9 = arith.constant 0 : i32
    %11 = arith.cmpi ne, %10, %c0_i32_9 : i32
    scf.if %11 {
      %c0_10 = arith.constant 0 : index
      %c0_11 = arith.constant 0 : index
      %12 = vector.load %arg7[%c0_10, %c0_11] : memref<16x96xf32, #tpu.memory_space<vmem>>, vector<16x96xf32>
      %c0_12 = arith.constant 0 : index
      %c0_13 = arith.constant 0 : index
      %13 = vector.load %arg5[%c0_12, %c0_13] : memref<1x96xf32, #tpu.memory_space<vmem>>, vector<1x96xf32>
      %14 = vector.broadcast %13 : vector<1x96xf32> to vector<16x96xf32>
      %15 = arith.addf %12, %14 : vector<16x96xf32>
      %c0_14 = arith.constant 0 : index
      %c0_15 = arith.constant 0 : index
      %16 = vector.load %arg6[%c0_14, %c0_15] : memref<16x96xf32, #tpu.memory_space<vmem>>, vector<16x96xf32>
      tpu.vector_store %arg6[%c0_14, %c0_15], %15 {strides = array<i32>} : memref<16x96xf32, #tpu.memory_space<vmem>>, vector<16x96xf32>,
    } else {
    }
    return
  }
  func.func @transform_0(%arg0: i32, %arg1: i32, %arg2: i32) -> (i32, i32) {
    %c0_i32 = arith.constant 0 : i32
    return %arg0, %arg2 : i32, i32
  }
  func.func @transform_1(%arg0: i32, %arg1: i32, %arg2: i32) -> (i32, i32) {
    %c0_i32 = arith.constant 0 : i32
    return %arg2, %arg1 : i32, i32
  }
  func.func @transform_2(%arg0: i32, %arg1: i32, %arg2: i32) -> (i32, i32) {
    %c0_i32 = arith.constant 0 : i32
    %c0_i32_0 = arith.constant 0 : i32
    return %c0_i32, %arg1 : i32, i32
  }
  func.func @transform_3(%arg0: i32, %arg1: i32, %arg2: i32) -> (i32, i32) {
    %c0_i32 = arith.constant 0 : i32
    return %arg0, %arg1 : i32, i32
  }
}

module attributes {stable_mosaic.version = 11 : i64} {
  func.func @_layernorm_kernel(%arg0: i32, %arg1: memref<16x32xf32, #tpu.memory_space<vmem>>, %arg2: memref<1x32xf32, #tpu.memory_space<vmem>>, %arg3: memref<1x32xf32, #tpu.memory_space<vmem>>, %arg4: memref<1x32xf32, #tpu.memory_space<vmem>>, %arg5: memref<16x32xf32, #tpu.memory_space<vmem>>) attributes {dimension_semantics = [#tpu.dimension_semantics<parallel>], iteration_bounds = array<i64: 1>, scalar_prefetch = 0 : i64, scratch_operands = 0 : i64, tpu.core_type = #tpu.core_type<tc>, window_params = [{transform_indices = @transform_0, window_bounds = array<i64: 16, 32>}, {pipeline_mode = #tpu.pipeline_mode<synchronous>, transform_indices = @transform_1, window_bounds = array<i64: 1, 32>}, {pipeline_mode = #tpu.pipeline_mode<synchronous>, transform_indices = @transform_2, window_bounds = array<i64: 1, 32>}, {pipeline_mode = #tpu.pipeline_mode<synchronous>, transform_indices = @transform_3, window_bounds = array<i64: 1, 32>}, {transform_indices = @transform_4, window_bounds = array<i64: 16, 32>}]} {
    %c0 = arith.constant 0 : index
    %c0_0 = arith.constant 0 : index
    %0 = vector.load %arg1[%c0, %c0_0] : memref<16x32xf32, #tpu.memory_space<vmem>>, vector<16x32xf32>
    %cst = arith.constant dense<0.000000e+00> : vector<16xf32>
    %1 = vector.multi_reduction <add>, %0, %cst [1] : vector<16x32xf32> to vector<16xf32>
    %2 = vector.shape_cast %1 : vector<16xf32> to vector<16x1xf32>
    %cst_1 = arith.constant 3.200000e+01 : f32
    %3 = vector.broadcast %cst_1 : f32 to vector<16x1xf32>
    %4 = arith.divf %2, %3 : vector<16x1xf32>
    %5 = vector.broadcast %4 : vector<16x1xf32> to vector<16x32xf32>
    %6 = arith.subf %0, %5 : vector<16x32xf32>
    %7 = arith.mulf %6, %6 : vector<16x32xf32>
    %cst_2 = arith.constant dense<0.000000e+00> : vector<16xf32>
    %8 = vector.multi_reduction <add>, %7, %cst_2 [1] : vector<16x32xf32> to vector<16xf32>
    %9 = vector.shape_cast %8 : vector<16xf32> to vector<16x1xf32>
    %cst_3 = arith.constant 3.200000e+01 : f32
    %10 = vector.broadcast %cst_3 : f32 to vector<16x1xf32>
    %11 = arith.divf %9, %10 : vector<16x1xf32>
    %12 = vector.broadcast %4 : vector<16x1xf32> to vector<16x32xf32>
    %13 = arith.subf %0, %12 : vector<16x32xf32>
    %cst_4 = arith.constant 9.99999974E-6 : f32
    %14 = vector.broadcast %cst_4 : f32 to vector<16x1xf32>
    %15 = arith.addf %11, %14 : vector<16x1xf32>
    %16 = math.rsqrt %15 : vector<16x1xf32>
    %17 = vector.broadcast %16 : vector<16x1xf32> to vector<16x32xf32>
    %18 = arith.mulf %13, %17 : vector<16x32xf32>
    %c0_5 = arith.constant 0 : index
    %c0_6 = arith.constant 0 : index
    %19 = vector.load %arg2[%c0_5, %c0_6] : memref<1x32xf32, #tpu.memory_space<vmem>>, vector<1x32xf32>
    %20 = vector.broadcast %19 : vector<1x32xf32> to vector<16x32xf32>
    %21 = arith.mulf %18, %20 : vector<16x32xf32>
    %c0_7 = arith.constant 0 : index
    %c0_8 = arith.constant 0 : index
    %22 = vector.load %arg3[%c0_7, %c0_8] : memref<1x32xf32, #tpu.memory_space<vmem>>, vector<1x32xf32>
    %23 = vector.broadcast %22 : vector<1x32xf32> to vector<16x32xf32>
    %24 = arith.addf %21, %23 : vector<16x32xf32>
    %c0_9 = arith.constant 0 : index
    %c0_10 = arith.constant 0 : index
    %25 = vector.load %arg4[%c0_9, %c0_10] : memref<1x32xf32, #tpu.memory_space<vmem>>, vector<1x32xf32>
    %26 = vector.broadcast %25 : vector<1x32xf32> to vector<16x32xf32>
    %27 = arith.addf %24, %26 : vector<16x32xf32>
    %c0_11 = arith.constant 0 : index
    %c0_12 = arith.constant 0 : index
    %28 = vector.load %arg5[%c0_11, %c0_12] : memref<16x32xf32, #tpu.memory_space<vmem>>, vector<16x32xf32>
    tpu.vector_store %arg5[%c0_11, %c0_12], %27 {strides = array<i32>} : memref<16x32xf32, #tpu.memory_space<vmem>>, vector<16x32xf32>,
    return
  }
  func.func @transform_0(%arg0: i32) -> (i32, i32) {
    %c0_i32 = arith.constant 0 : i32
    %c0_i32_0 = arith.constant 0 : i32
    return %arg0, %c0_i32 : i32, i32
  }
  func.func @transform_1(%arg0: i32) -> (i32, i32) {
    %c0_i32 = arith.constant 0 : i32
    %c0_i32_0 = arith.constant 0 : i32
    %c0_i32_1 = arith.constant 0 : i32
    return %c0_i32, %c0_i32_0 : i32, i32
  }
  func.func @transform_2(%arg0: i32) -> (i32, i32) {
    %c0_i32 = arith.constant 0 : i32
    %c0_i32_0 = arith.constant 0 : i32
    %c0_i32_1 = arith.constant 0 : i32
    return %c0_i32, %c0_i32_0 : i32, i32
  }
  func.func @transform_3(%arg0: i32) -> (i32, i32) {
    %c0_i32 = arith.constant 0 : i32
    %c0_i32_0 = arith.constant 0 : i32
    %c0_i32_1 = arith.constant 0 : i32
    return %c0_i32, %c0_i32_0 : i32, i32
  }
  func.func @transform_4(%arg0: i32) -> (i32, i32) {
    %c0_i32 = arith.constant 0 : i32
    %c0_i32_0 = arith.constant 0 : i32
    return %arg0, %c0_i32 : i32, i32
  }
}

module attributes {stable_mosaic.version = 11 : i64} {
  func.func @_linear_kernel(%arg0: i32, %arg1: i32, %arg2: i32, %arg3: memref<16x32xf32, #tpu.memory_space<vmem>>, %arg4: memref<32x32xf32, #tpu.memory_space<vmem>>, %arg5: memref<1x32xf32, #tpu.memory_space<vmem>>, %arg6: memref<16x32xf32, #tpu.memory_space<vmem>>, %arg7: memref<16x32xf32, #tpu.memory_space<vmem>>, %arg8: memref<16x32xf32, #tpu.memory_space<vmem>>) attributes {dimension_semantics = [#tpu.dimension_semantics<parallel>, #tpu.dimension_semantics<parallel>, #tpu.dimension_semantics<arbitrary>], iteration_bounds = array<i64: 1, 1, 1>, scalar_prefetch = 0 : i64, scratch_operands = 1 : i64, tpu.core_type = #tpu.core_type<tc>, window_params = [{transform_indices = @transform_0, window_bounds = array<i64: 16, 32>}, {transform_indices = @transform_1, window_bounds = array<i64: 32, 32>}, {transform_indices = @transform_2, window_bounds = array<i64: 1, 32>}, {transform_indices = @transform_3, window_bounds = array<i64: 16, 32>}, {transform_indices = @transform_4, window_bounds = array<i64: 16, 32>}]} {
    %c0_i32 = arith.constant 0 : i32
    %0 = arith.cmpi eq, %arg2, %c0_i32 : i32
    %1 = arith.extui %0 : i1 to i32
    %c0_i32_0 = arith.constant 0 : i32
    %2 = arith.cmpi ne, %1, %c0_i32_0 : i32
    scf.if %2 {
      %cst_10 = arith.constant 0.000000e+00 : f32
      %12 = vector.broadcast %cst_10 : f32 to vector<16x32xf32>
      %c0_11 = arith.constant 0 : index
      %c0_12 = arith.constant 0 : index
      %13 = vector.load %arg8[%c0_11, %c0_12] : memref<16x32xf32, #tpu.memory_space<vmem>>, vector<16x32xf32>
      tpu.vector_store %arg8[%c0_11, %c0_12], %12 {strides = array<i32>} : memref<16x32xf32, #tpu.memory_space<vmem>>, vector<16x32xf32>,
    } else {
    }
    %c0 = arith.constant 0 : index
    %c0_1 = arith.constant 0 : index
    %3 = vector.load %arg8[%c0, %c0_1] : memref<16x32xf32, #tpu.memory_space<vmem>>, vector<16x32xf32>
    %c0_2 = arith.constant 0 : index
    %c0_3 = arith.constant 0 : index
    %4 = vector.load %arg3[%c0_2, %c0_3] : memref<16x32xf32, #tpu.memory_space<vmem>>, vector<16x32xf32>
    %c0_4 = arith.constant 0 : index
    %c0_5 = arith.constant 0 : index
    %5 = vector.load %arg4[%c0_4, %c0_5] : memref<32x32xf32, #tpu.memory_space<vmem>>, vector<32x32xf32>
    %cst = arith.constant dense<0.000000e+00> : vector<16x32xf32>
    %6 = tpu.matmul %4, %5, %cst {dimension_numbers = #tpu.dot_dimension_numbers<[1], [0], [0], [1], [0, 0, 1, 1], [], []>} : vector<16x32xf32>, vector<32x32xf32>, vector<16x32xf32> -> vector<16x32xf32>
    %7 = arith.addf %3, %6 : vector<16x32xf32>
    %c0_6 = arith.constant 0 : index
    %c0_7 = arith.constant 0 : index
    %8 = vector.load %arg8[%c0_6, %c0_7] : memref<16x32xf32, #tpu.memory_space<vmem>>, vector<16x32xf32>
    tpu.vector_store %arg8[%c0_6, %c0_7], %7 {strides = array<i32>} : memref<16x32xf32, #tpu.memory_space<vmem>>, vector<16x32xf32>,
    %c0_i32_8 = arith.constant 0 : i32
    %9 = arith.cmpi eq, %arg2, %c0_i32_8 : i32
    %10 = arith.extui %9 : i1 to i32
    %c0_i32_9 = arith.constant 0 : i32
    %11 = arith.cmpi ne, %10, %c0_i32_9 : i32
    scf.if %11 {
      %c0_10 = arith.constant 0 : index
      %c0_11 = arith.constant 0 : index
      %12 = vector.load %arg8[%c0_10, %c0_11] : memref<16x32xf32, #tpu.memory_space<vmem>>, vector<16x32xf32>
      %c0_12 = arith.constant 0 : index
      %c0_13 = arith.constant 0 : index
      %13 = vector.load %arg5[%c0_12, %c0_13] : memref<1x32xf32, #tpu.memory_space<vmem>>, vector<1x32xf32>
      %14 = vector.broadcast %13 : vector<1x32xf32> to vector<16x32xf32>
      %15 = arith.addf %12, %14 : vector<16x32xf32>
      %c0_14 = arith.constant 0 : index
      %c0_15 = arith.constant 0 : index
      %16 = vector.load %arg6[%c0_14, %c0_15] : memref<16x32xf32, #tpu.memory_space<vmem>>, vector<16x32xf32>
      %17 = arith.addf %15, %16 : vector<16x32xf32>
      %c0_16 = arith.constant 0 : index
      %c0_17 = arith.constant 0 : index
      %18 = vector.load %arg7[%c0_16, %c0_17] : memref<16x32xf32, #tpu.memory_space<vmem>>, vector<16x32xf32>
      tpu.vector_store %arg7[%c0_16, %c0_17], %17 {strides = array<i32>} : memref<16x32xf32, #tpu.memory_space<vmem>>, vector<16x32xf32>,
    } else {
    }
    return
  }
  func.func @transform_0(%arg0: i32, %arg1: i32, %arg2: i32) -> (i32, i32) {
    %c0_i32 = arith.constant 0 : i32
    return %arg0, %arg2 : i32, i32
  }
  func.func @transform_1(%arg0: i32, %arg1: i32, %arg2: i32) -> (i32, i32) {
    %c0_i32 = arith.constant 0 : i32
    return %arg2, %arg1 : i32, i32
  }
  func.func @transform_2(%arg0: i32, %arg1: i32, %arg2: i32) -> (i32, i32) {
    %c0_i32 = arith.constant 0 : i32
    %c0_i32_0 = arith.constant 0 : i32
    return %c0_i32, %arg1 : i32, i32
  }
  func.func @transform_3(%arg0: i32, %arg1: i32, %arg2: i32) -> (i32, i32) {
    %c0_i32 = arith.constant 0 : i32
    return %arg0, %arg1 : i32, i32
  }
  func.func @transform_4(%arg0: i32, %arg1: i32, %arg2: i32) -> (i32, i32) {
    %c0_i32 = arith.constant 0 : i32
    return %arg0, %arg1 : i32, i32
  }
}

module attributes {stable_mosaic.version = 11 : i64} {
  func.func @_attention_kernel(%arg0: i32, %arg1: memref<1x8x1x2x16xf32, #tpu.memory_space<vmem>>, %arg2: memref<1x8x1x2x16xf32, #tpu.memory_space<vmem>>, %arg3: memref<1x8x1x2x16xf32, #tpu.memory_space<vmem>>, %arg4: memref<1x1x8xf32, #tpu.memory_space<vmem>>, %arg5: memref<1x8x32xf32, #tpu.memory_space<vmem>>) attributes {dimension_semantics = [#tpu.dimension_semantics<parallel>], iteration_bounds = array<i64: 2>, scalar_prefetch = 0 : i64, scratch_operands = 0 : i64, tpu.core_type = #tpu.core_type<tc>, window_params = [{transform_indices = @transform_0, window_bounds = array<i64: 1, 8, 1, 2, 16>}, {transform_indices = @transform_1, window_bounds = array<i64: 1, 8, 1, 2, 16>}, {transform_indices = @transform_2, window_bounds = array<i64: 1, 8, 1, 2, 16>}, {transform_indices = @transform_3, window_bounds = array<i64: 1, 1, 8>}, {transform_indices = @transform_4, window_bounds = array<i64: 1, 8, 32>}]} {
    %c0 = arith.constant 0 : index
    %c0_0 = arith.constant 0 : index
    %c0_1 = arith.constant 0 : index
    %c0_2 = arith.constant 0 : index
    %c0_3 = arith.constant 0 : index
    %0 = vector.load %arg1[%c0, %c0_0, %c0_1, %c0_2, %c0_3] : memref<1x8x1x2x16xf32, #tpu.memory_space<vmem>>, vector<1x8x1x2x16xf32>
    %1 = vector.shape_cast %0 : vector<1x8x1x2x16xf32> to vector<8x2x16xf32>
    %c0_4 = arith.constant 0 : index
    %c0_5 = arith.constant 0 : index
    %c0_6 = arith.constant 0 : index
    %c0_7 = arith.constant 0 : index
    %c0_8 = arith.constant 0 : index
    %2 = vector.load %arg2[%c0_4, %c0_5, %c0_6, %c0_7, %c0_8] : memref<1x8x1x2x16xf32, #tpu.memory_space<vmem>>, vector<1x8x1x2x16xf32>
    %3 = vector.shape_cast %2 : vector<1x8x1x2x16xf32> to vector<8x2x16xf32>
    %c0_9 = arith.constant 0 : index
    %c0_10 = arith.constant 0 : index
    %c0_11 = arith.constant 0 : index
    %c0_12 = arith.constant 0 : index
    %c0_13 = arith.constant 0 : index
    %4 = vector.load %arg3[%c0_9, %c0_10, %c0_11, %c0_12, %c0_13] : memref<1x8x1x2x16xf32, #tpu.memory_space<vmem>>, vector<1x8x1x2x16xf32>
    %5 = vector.shape_cast %4 : vector<1x8x1x2x16xf32> to vector<8x2x16xf32>
    %c0_14 = arith.constant 0 : index
    %c0_15 = arith.constant 0 : index
    %c0_16 = arith.constant 0 : index
    %6 = vector.load %arg4[%c0_14, %c0_15, %c0_16] : memref<1x1x8xf32, #tpu.memory_space<vmem>>, vector<1x1x8xf32>
    %7 = vector.shape_cast %6 : vector<1x1x8xf32> to vector<1x8xf32>
    %cst = arith.constant 1.000000e+00 : f32
    %8 = vector.broadcast %cst : f32 to vector<1x8xf32>
    %9 = arith.subf %8, %7 : vector<1x8xf32>
    %cst_17 = arith.constant -1.000000e+04 : f32
    %10 = vector.broadcast %cst_17 : f32 to vector<1x8xf32>
    %11 = arith.mulf %9, %10 : vector<1x8xf32>
    %12 = tpu.iota {dimensions = array<i32: 0>} : vector<8x8xi32>
    %13 = tpu.iota {dimensions = array<i32: 1>} : vector<8x8xi32>
    %14 = arith.cmpi sle, %13, %12 : vector<8x8xi32>
    %15 = vector.extract_strided_slice %1 {offsets = [0, 0, 0], sizes = [8, 1, 16], strides = [1, 1, 1]} : vector<8x2x16xf32> to vector<8x1x16xf32>
    %16 = vector.shape_cast %15 : vector<8x1x16xf32> to vector<8x16xf32>
    %17 = vector.extract_strided_slice %3 {offsets = [0, 0, 0], sizes = [8, 1, 16], strides = [1, 1, 1]} : vector<8x2x16xf32> to vector<8x1x16xf32>
    %18 = vector.shape_cast %17 : vector<8x1x16xf32> to vector<8x16xf32>
    %19 = vector.extract_strided_slice %5 {offsets = [0, 0, 0], sizes = [8, 1, 16], strides = [1, 1, 1]} : vector<8x2x16xf32> to vector<8x1x16xf32>
    %20 = vector.shape_cast %19 : vector<8x1x16xf32> to vector<8x16xf32>
    %cst_18 = arith.constant dense<0.000000e+00> : vector<8x8xf32>
    %21 = tpu.matmul %16, %18, %cst_18 {dimension_numbers = #tpu.dot_dimension_numbers<[1], [1], [0], [0], [0, 0, 1, 0], [], []>} : vector<8x16xf32>, vector<8x16xf32>, vector<8x8xf32> -> vector<8x8xf32>
    %cst_19 = arith.constant 2.500000e-01 : f32
    %22 = vector.broadcast %cst_19 : f32 to vector<8x8xf32>
    %23 = arith.mulf %21, %22 : vector<8x8xf32>
    %24 = vector.broadcast %11 : vector<1x8xf32> to vector<8x8xf32>
    %25 = arith.addf %23, %24 : vector<8x8xf32>
    %cst_20 = arith.constant -1.000000e+09 : f32
    %26 = vector.broadcast %cst_20 : f32 to vector<8x8xf32>
    %27 = arith.select %14, %25, %26 : vector<8x8xi1>, vector<8x8xf32>
    %cst_21 = arith.constant dense<0xFF800000> : vector<8xf32>
    %28 = vector.multi_reduction <maximumf>, %27, %cst_21 [1] : vector<8x8xf32> to vector<8xf32>
    %29 = vector.shape_cast %28 : vector<8xf32> to vector<8x1xf32>
    %30 = vector.broadcast %29 : vector<8x1xf32> to vector<8x8xf32>
    %31 = arith.subf %27, %30 : vector<8x8xf32>
    %32 = math.exp %31 : vector<8x8xf32>
    %cst_22 = arith.constant dense<0.000000e+00> : vector<8xf32>
    %33 = vector.multi_reduction <add>, %32, %cst_22 [1] : vector<8x8xf32> to vector<8xf32>
    %34 = vector.shape_cast %33 : vector<8xf32> to vector<8x1xf32>
    %35 = tpu.reciprocal %34 {approx = true} : vector<8x1xf32> -> vector<8x1xf32>
    %36 = vector.broadcast %35 : vector<8x1xf32> to vector<8x8xf32>
    %37 = arith.mulf %32, %36 : vector<8x8xf32>
    %cst_23 = arith.constant dense<0.000000e+00> : vector<8x16xf32>
    %38 = tpu.matmul %37, %20, %cst_23 {dimension_numbers = #tpu.dot_dimension_numbers<[1], [0], [0], [1], [0, 0, 1, 1], [], []>} : vector<8x8xf32>, vector<8x16xf32>, vector<8x16xf32> -> vector<8x16xf32>
    %c0_24 = arith.constant 0 : index
    %c0_25 = arith.constant 0 : index
    %c0_26 = arith.constant 0 : index
    %39 = vector.load %arg5[%c0_24, %c0_25, %c0_26] : memref<1x8x32xf32, #tpu.memory_space<vmem>>, vector<1x8x16xf32>
    %40 = vector.shape_cast %39 : vector<1x8x16xf32> to vector<8x16xf32>
    %41 = vector.shape_cast %38 : vector<8x16xf32> to vector<1x8x16xf32>
    tpu.vector_store %arg5[%c0_24, %c0_25, %c0_26], %41 {strides = array<i32>} : memref<1x8x32xf32, #tpu.memory_space<vmem>>, vector<1x8x16xf32>,
    %42 = vector.extract_strided_slice %1 {offsets = [0, 1, 0], sizes = [8, 1, 16], strides = [1, 1, 1]} : vector<8x2x16xf32> to vector<8x1x16xf32>
    %43 = vector.shape_cast %42 : vector<8x1x16xf32> to vector<8x16xf32>
    %44 = vector.extract_strided_slice %3 {offsets = [0, 1, 0], sizes = [8, 1, 16], strides = [1, 1, 1]} : vector<8x2x16xf32> to vector<8x1x16xf32>
    %45 = vector.shape_cast %44 : vector<8x1x16xf32> to vector<8x16xf32>
    %46 = vector.extract_strided_slice %5 {offsets = [0, 1, 0], sizes = [8, 1, 16], strides = [1, 1, 1]} : vector<8x2x16xf32> to vector<8x1x16xf32>
    %47 = vector.shape_cast %46 : vector<8x1x16xf32> to vector<8x16xf32>
    %cst_27 = arith.constant dense<0.000000e+00> : vector<8x8xf32>
    %48 = tpu.matmul %43, %45, %cst_27 {dimension_numbers = #tpu.dot_dimension_numbers<[1], [1], [0], [0], [0, 0, 1, 0], [], []>} : vector<8x16xf32>, vector<8x16xf32>, vector<8x8xf32> -> vector<8x8xf32>
    %cst_28 = arith.constant 2.500000e-01 : f32
    %49 = vector.broadcast %cst_28 : f32 to vector<8x8xf32>
    %50 = arith.mulf %48, %49 : vector<8x8xf32>
    %51 = vector.broadcast %11 : vector<1x8xf32> to vector<8x8xf32>
    %52 = arith.addf %50, %51 : vector<8x8xf32>
    %cst_29 = arith.constant -1.000000e+09 : f32
    %53 = vector.broadcast %cst_29 : f32 to vector<8x8xf32>
    %54 = arith.select %14, %52, %53 : vector<8x8xi1>, vector<8x8xf32>
    %cst_30 = arith.constant dense<0xFF800000> : vector<8xf32>
    %55 = vector.multi_reduction <maximumf>, %54, %cst_30 [1] : vector<8x8xf32> to vector<8xf32>
    %56 = vector.shape_cast %55 : vector<8xf32> to vector<8x1xf32>
    %57 = vector.broadcast %56 : vector<8x1xf32> to vector<8x8xf32>
    %58 = arith.subf %54, %57 : vector<8x8xf32>
    %59 = math.exp %58 : vector<8x8xf32>
    %cst_31 = arith.constant dense<0.000000e+00> : vector<8xf32>
    %60 = vector.multi_reduction <add>, %59, %cst_31 [1] : vector<8x8xf32> to vector<8xf32>
    %61 = vector.shape_cast %60 : vector<8xf32> to vector<8x1xf32>
    %62 = tpu.reciprocal %61 {approx = true} : vector<8x1xf32> -> vector<8x1xf32>
    %63 = vector.broadcast %62 : vector<8x1xf32> to vector<8x8xf32>
    %64 = arith.mulf %59, %63 : vector<8x8xf32>
    %cst_32 = arith.constant dense<0.000000e+00> : vector<8x16xf32>
    %65 = tpu.matmul %64, %47, %cst_32 {dimension_numbers = #tpu.dot_dimension_numbers<[1], [0], [0], [1], [0, 0, 1, 1], [], []>} : vector<8x8xf32>, vector<8x16xf32>, vector<8x16xf32> -> vector<8x16xf32>
    %c0_33 = arith.constant 0 : index
    %c0_34 = arith.constant 0 : index
    %c16 = arith.constant 16 : index
    %66 = vector.load %arg5[%c0_33, %c0_34, %c16] : memref<1x8x32xf32, #tpu.memory_space<vmem>>, vector<1x8x16xf32>
    %67 = vector.shape_cast %66 : vector<1x8x16xf32> to vector<8x16xf32>
    %68 = vector.shape_cast %65 : vector<8x16xf32> to vector<1x8x16xf32>
    tpu.vector_store %arg5[%c0_33, %c0_34, %c16], %68 {strides = array<i32>} : memref<1x8x32xf32, #tpu.memory_space<vmem>>, vector<1x8x16xf32>,
    return
  }
  func.func @transform_0(%arg0: i32) -> (i32, i32, i32, i32, i32) {
    %c0_i32 = arith.constant 0 : i32
    %c0_i32_0 = arith.constant 0 : i32
    %c0_i32_1 = arith.constant 0 : i32
    %c0_i32_2 = arith.constant 0 : i32
    %c0_i32_3 = arith.constant 0 : i32
    return %arg0, %c0_i32, %c0_i32_0, %c0_i32_1, %c0_i32_2 : i32, i32, i32, i32, i32
  }
  func.func @transform_1(%arg0: i32) -> (i32, i32, i32, i32, i32) {
    %c0_i32 = arith.constant 0 : i32
    %c1_i32 = arith.constant 1 : i32
    %c0_i32_0 = arith.constant 0 : i32
    %c0_i32_1 = arith.constant 0 : i32
    %c0_i32_2 = arith.constant 0 : i32
    return %arg0, %c0_i32, %c1_i32, %c0_i32_0, %c0_i32_1 : i32, i32, i32, i32, i32
  }
  func.func @transform_2(%arg0: i32) -> (i32, i32, i32, i32, i32) {
    %c0_i32 = arith.constant 0 : i32
    %c2_i32 = arith.constant 2 : i32
    %c0_i32_0 = arith.constant 0 : i32
    %c0_i32_1 = arith.constant 0 : i32
    %c0_i32_2 = arith.constant 0 : i32
    return %arg0, %c0_i32, %c2_i32, %c0_i32_0, %c0_i32_1 : i32, i32, i32, i32, i32
  }
  func.func @transform_3(%arg0: i32) -> (i32, i32, i32) {
    %c0_i32 = arith.constant 0 : i32
    %c0_i32_0 = arith.constant 0 : i32
    %c0_i32_1 = arith.constant 0 : i32
    return %arg0, %c0_i32, %c0_i32_0 : i32, i32, i32
  }
  func.func @transform_4(%arg0: i32) -> (i32, i32, i32) {
    %c0_i32 = arith.constant 0 : i32
    %c0_i32_0 = arith.constant 0 : i32
    %c0_i32_1 = arith.constant 0 : i32
    return %arg0, %c0_i32, %c0_i32_0 : i32, i32, i32
  }
}

module attributes {stable_mosaic.version = 11 : i64} {
  func.func @_linear_kernel(%arg0: i32, %arg1: i32, %arg2: i32, %arg3: memref<16x32xf32, #tpu.memory_space<vmem>>, %arg4: memref<32x128xf32, #tpu.memory_space<vmem>>, %arg5: memref<1x128xf32, #tpu.memory_space<vmem>>, %arg6: memref<16x128xf32, #tpu.memory_space<vmem>>, %arg7: memref<16x128xf32, #tpu.memory_space<vmem>>) attributes {dimension_semantics = [#tpu.dimension_semantics<parallel>, #tpu.dimension_semantics<parallel>, #tpu.dimension_semantics<arbitrary>], iteration_bounds = array<i64: 1, 1, 1>, scalar_prefetch = 0 : i64, scratch_operands = 1 : i64, tpu.core_type = #tpu.core_type<tc>, window_params = [{transform_indices = @transform_0, window_bounds = array<i64: 16, 32>}, {transform_indices = @transform_1, window_bounds = array<i64: 32, 128>}, {transform_indices = @transform_2, window_bounds = array<i64: 1, 128>}, {transform_indices = @transform_3, window_bounds = array<i64: 16, 128>}]} {
    %c0_i32 = arith.constant 0 : i32
    %0 = arith.cmpi eq, %arg2, %c0_i32 : i32
    %1 = arith.extui %0 : i1 to i32
    %c0_i32_0 = arith.constant 0 : i32
    %2 = arith.cmpi ne, %1, %c0_i32_0 : i32
    scf.if %2 {
      %cst_10 = arith.constant 0.000000e+00 : f32
      %12 = vector.broadcast %cst_10 : f32 to vector<16x128xf32>
      %c0_11 = arith.constant 0 : index
      %c0_12 = arith.constant 0 : index
      %13 = vector.load %arg7[%c0_11, %c0_12] : memref<16x128xf32, #tpu.memory_space<vmem>>, vector<16x128xf32>
      tpu.vector_store %arg7[%c0_11, %c0_12], %12 {strides = array<i32>} : memref<16x128xf32, #tpu.memory_space<vmem>>, vector<16x128xf32>,
    } else {
    }
    %c0 = arith.constant 0 : index
    %c0_1 = arith.constant 0 : index
    %3 = vector.load %arg7[%c0, %c0_1] : memref<16x128xf32, #tpu.memory_space<vmem>>, vector<16x128xf32>
    %c0_2 = arith.constant 0 : index
    %c0_3 = arith.constant 0 : index
    %4 = vector.load %arg3[%c0_2, %c0_3] : memref<16x32xf32, #tpu.memory_space<vmem>>, vector<16x32xf32>
    %c0_4 = arith.constant 0 : index
    %c0_5 = arith.constant 0 : index
    %5 = vector.load %arg4[%c0_4, %c0_5] : memref<32x128xf32, #tpu.memory_space<vmem>>, vector<32x128xf32>
    %cst = arith.constant dense<0.000000e+00> : vector<16x128xf32>
    %6 = tpu.matmul %4, %5, %cst {dimension_numbers = #tpu.dot_dimension_numbers<[1], [0], [0], [1], [0, 0, 1, 1], [], []>} : vector<16x32xf32>, vector<32x128xf32>, vector<16x128xf32> -> vector<16x128xf32>
    %7 = arith.addf %3, %6 : vector<16x128xf32>
    %c0_6 = arith.constant 0 : index
    %c0_7 = arith.constant 0 : index
    %8 = vector.load %arg7[%c0_6, %c0_7] : memref<16x128xf32, #tpu.memory_space<vmem>>, vector<16x128xf32>
    tpu.vector_store %arg7[%c0_6, %c0_7], %7 {strides = array<i32>} : memref<16x128xf32, #tpu.memory_space<vmem>>, vector<16x128xf32>,
    %c0_i32_8 = arith.constant 0 : i32
    %9 = arith.cmpi eq, %arg2, %c0_i32_8 : i32
    %10 = arith.extui %9 : i1 to i32
    %c0_i32_9 = arith.constant 0 : i32
    %11 = arith.cmpi ne, %10, %c0_i32_9 : i32
    scf.if %11 {
      %c0_10 = arith.constant 0 : index
      %c0_11 = arith.constant 0 : index
      %12 = vector.load %arg7[%c0_10, %c0_11] : memref<16x128xf32, #tpu.memory_space<vmem>>, vector<16x128xf32>
      %c0_12 = arith.constant 0 : index
      %c0_13 = arith.constant 0 : index
      %13 = vector.load %arg5[%c0_12, %c0_13] : memref<1x128xf32, #tpu.memory_space<vmem>>, vector<1x128xf32>
      %14 = vector.broadcast %13 : vector<1x128xf32> to vector<16x128xf32>
      %15 = arith.addf %12, %14 : vector<16x128xf32>
      %16 = arith.mulf %15, %15 : vector<16x128xf32>
      %17 = arith.mulf %15, %16 : vector<16x128xf32>
      %cst_14 = arith.constant 4.471500e-02 : f32
      %18 = vector.broadcast %cst_14 : f32 to vector<16x128xf32>
      %19 = arith.mulf %18, %17 : vector<16x128xf32>
      %20 = arith.addf %15, %19 : vector<16x128xf32>
      %cst_15 = arith.constant 0.797884583 : f32
      %21 = vector.broadcast %cst_15 : f32 to vector<16x128xf32>
      %22 = arith.mulf %21, %20 : vector<16x128xf32>
      %23 = math.tanh %22 : vector<16x128xf32>
      %cst_16 = arith.constant 1.000000e+00 : f32
      %24 = vector.broadcast %cst_16 : f32 to vector<16x128xf32>
      %25 = arith.addf %24, %23 : vector<16x128xf32>
      %cst_17 = arith.constant 5.000000e-01 : f32
      %26 = vector.broadcast %cst_17 : f32 to vector<16x128xf32>
      %27 = arith.mulf %26, %25 : vector<16x128xf32>
      %28 = arith.mulf %15, %27 : vector<16x128xf32>
      %c0_18 = arith.constant 0 : index
      %c0_19 = arith.constant 0 : index
      %29 = vector.load %arg6[%c0_18, %c0_19] : memref<16x128xf32, #tpu.memory_space<vmem>>, vector<16x128xf32>
      tpu.vector_store %arg6[%c0_18, %c0_19], %28 {strides = array<i32>} : memref<16x128xf32, #tpu.memory_space<vmem>>, vector<16x128xf32>,
    } else {
    }
    return
  }
  func.func @transform_0(%arg0: i32, %arg1: i32, %arg2: i32) -> (i32, i32) {
    %c0_i32 = arith.constant 0 : i32
    return %arg0, %arg2 : i32, i32
  }
  func.func @transform_1(%arg0: i32, %arg1: i32, %arg2: i32) -> (i32, i32) {
    %c0_i32 = arith.constant 0 : i32
    return %arg2, %arg1 : i32, i32
  }
  func.func @transform_2(%arg0: i32, %arg1: i32, %arg2: i32) -> (i32, i32) {
    %c0_i32 = arith.constant 0 : i32
    %c0_i32_0 = arith.constant 0 : i32
    return %c0_i32, %arg1 : i32, i32
  }
  func.func @transform_3(%arg0: i32, %arg1: i32, %arg2: i32) -> (i32, i32) {
    %c0_i32 = arith.constant 0 : i32
    return %arg0, %arg1 : i32, i32
  }
}

module attributes {stable_mosaic.version = 11 : i64} {
  func.func @_linear_kernel(%arg0: i32, %arg1: i32, %arg2: i32, %arg3: memref<16x128xf32, #tpu.memory_space<vmem>>, %arg4: memref<128x32xf32, #tpu.memory_space<vmem>>, %arg5: memref<1x32xf32, #tpu.memory_space<vmem>>, %arg6: memref<16x32xf32, #tpu.memory_space<vmem>>, %arg7: memref<16x32xf32, #tpu.memory_space<vmem>>, %arg8: memref<16x32xf32, #tpu.memory_space<vmem>>) attributes {dimension_semantics = [#tpu.dimension_semantics<parallel>, #tpu.dimension_semantics<parallel>, #tpu.dimension_semantics<arbitrary>], iteration_bounds = array<i64: 1, 1, 1>, scalar_prefetch = 0 : i64, scratch_operands = 1 : i64, tpu.core_type = #tpu.core_type<tc>, window_params = [{transform_indices = @transform_0, window_bounds = array<i64: 16, 128>}, {transform_indices = @transform_1, window_bounds = array<i64: 128, 32>}, {transform_indices = @transform_2, window_bounds = array<i64: 1, 32>}, {transform_indices = @transform_3, window_bounds = array<i64: 16, 32>}, {transform_indices = @transform_4, window_bounds = array<i64: 16, 32>}]} {
    %c0_i32 = arith.constant 0 : i32
    %0 = arith.cmpi eq, %arg2, %c0_i32 : i32
    %1 = arith.extui %0 : i1 to i32
    %c0_i32_0 = arith.constant 0 : i32
    %2 = arith.cmpi ne, %1, %c0_i32_0 : i32
    scf.if %2 {
      %cst_10 = arith.constant 0.000000e+00 : f32
      %12 = vector.broadcast %cst_10 : f32 to vector<16x32xf32>
      %c0_11 = arith.constant 0 : index
      %c0_12 = arith.constant 0 : index
      %13 = vector.load %arg8[%c0_11, %c0_12] : memref<16x32xf32, #tpu.memory_space<vmem>>, vector<16x32xf32>
      tpu.vector_store %arg8[%c0_11, %c0_12], %12 {strides = array<i32>} : memref<16x32xf32, #tpu.memory_space<vmem>>, vector<16x32xf32>,
    } else {
    }
    %c0 = arith.constant 0 : index
    %c0_1 = arith.constant 0 : index
    %3 = vector.load %arg8[%c0, %c0_1] : memref<16x32xf32, #tpu.memory_space<vmem>>, vector<16x32xf32>
    %c0_2 = arith.constant 0 : index
    %c0_3 = arith.constant 0 : index
    %4 = vector.load %arg3[%c0_2, %c0_3] : memref<16x128xf32, #tpu.memory_space<vmem>>, vector<16x128xf32>
    %c0_4 = arith.constant 0 : index
    %c0_5 = arith.constant 0 : index
    %5 = vector.load %arg4[%c0_4, %c0_5] : memref<128x32xf32, #tpu.memory_space<vmem>>, vector<128x32xf32>
    %cst = arith.constant dense<0.000000e+00> : vector<16x32xf32>
    %6 = tpu.matmul %4, %5, %cst {dimension_numbers = #tpu.dot_dimension_numbers<[1], [0], [0], [1], [0, 0, 1, 1], [], []>} : vector<16x128xf32>, vector<128x32xf32>, vector<16x32xf32> -> vector<16x32xf32>
    %7 = arith.addf %3, %6 : vector<16x32xf32>
    %c0_6 = arith.constant 0 : index
    %c0_7 = arith.constant 0 : index
    %8 = vector.load %arg8[%c0_6, %c0_7] : memref<16x32xf32, #tpu.memory_space<vmem>>, vector<16x32xf32>
    tpu.vector_store %arg8[%c0_6, %c0_7], %7 {strides = array<i32>} : memref<16x32xf32, #tpu.memory_space<vmem>>, vector<16x32xf32>,
    %c0_i32_8 = arith.constant 0 : i32
    %9 = arith.cmpi eq, %arg2, %c0_i32_8 : i32
    %10 = arith.extui %9 : i1 to i32
    %c0_i32_9 = arith.constant 0 : i32
    %11 = arith.cmpi ne, %10, %c0_i32_9 : i32
    scf.if %11 {
      %c0_10 = arith.constant 0 : index
      %c0_11 = arith.constant 0 : index
      %12 = vector.load %arg8[%c0_10, %c0_11] : memref<16x32xf32, #tpu.memory_space<vmem>>, vector<16x32xf32>
      %c0_12 = arith.constant 0 : index
      %c0_13 = arith.constant 0 : index
      %13 = vector.load %arg5[%c0_12, %c0_13] : memref<1x32xf32, #tpu.memory_space<vmem>>, vector<1x32xf32>
      %14 = vector.broadcast %13 : vector<1x32xf32> to vector<16x32xf32>
      %15 = arith.addf %12, %14 : vector<16x32xf32>
      %c0_14 = arith.constant 0 : index
      %c0_15 = arith.constant 0 : index
      %16 = vector.load %arg6[%c0_14, %c0_15] : memref<16x32xf32, #tpu.memory_space<vmem>>, vector<16x32xf32>
      %17 = arith.addf %15, %16 : vector<16x32xf32>
      %c0_16 = arith.constant 0 : index
      %c0_17 = arith.constant 0 : index
      %18 = vector.load %arg7[%c0_16, %c0_17] : memref<16x32xf32, #tpu.memory_space<vmem>>, vector<16x32xf32>
      tpu.vector_store %arg7[%c0_16, %c0_17], %17 {strides = array<i32>} : memref<16x32xf32, #tpu.memory_space<vmem>>, vector<16x32xf32>,
    } else {
    }
    return
  }
  func.func @transform_0(%arg0: i32, %arg1: i32, %arg2: i32) -> (i32, i32) {
    %c0_i32 = arith.constant 0 : i32
    return %arg0, %arg2 : i32, i32
  }
  func.func @transform_1(%arg0: i32, %arg1: i32, %arg2: i32) -> (i32, i32) {
    %c0_i32 = arith.constant 0 : i32
    return %arg2, %arg1 : i32, i32
  }
  func.func @transform_2(%arg0: i32, %arg1: i32, %arg2: i32) -> (i32, i32) {
    %c0_i32 = arith.constant 0 : i32
    %c0_i32_0 = arith.constant 0 : i32
    return %c0_i32, %arg1 : i32, i32
  }
  func.func @transform_3(%arg0: i32, %arg1: i32, %arg2: i32) -> (i32, i32) {
    %c0_i32 = arith.constant 0 : i32
    return %arg0, %arg1 : i32, i32
  }
  func.func @transform_4(%arg0: i32, %arg1: i32, %arg2: i32) -> (i32, i32) {
    %c0_i32 = arith.constant 0 : i32
    return %arg0, %arg1 : i32, i32
  }
}

module attributes {stable_mosaic.version = 11 : i64} {
  func.func @_lm_head_kernel(%arg0: i32, %arg1: i32, %arg2: i32, %arg3: memref<16x32xf32, #tpu.memory_space<vmem>>, %arg4: memref<64x32xf32, #tpu.memory_space<vmem>>, %arg5: memref<16x64xf32, #tpu.memory_space<vmem>>, %arg6: memref<16x64xf32, #tpu.memory_space<vmem>>) attributes {dimension_semantics = [#tpu.dimension_semantics<parallel>, #tpu.dimension_semantics<parallel>, #tpu.dimension_semantics<arbitrary>], iteration_bounds = array<i64: 1, 1, 1>, scalar_prefetch = 0 : i64, scratch_operands = 1 : i64, tpu.core_type = #tpu.core_type<tc>, window_params = [{transform_indices = @transform_0, window_bounds = array<i64: 16, 32>}, {transform_indices = @transform_1, window_bounds = array<i64: 64, 32>}, {transform_indices = @transform_2, window_bounds = array<i64: 16, 64>}]} {
    %c0_i32 = arith.constant 0 : i32
    %0 = arith.cmpi eq, %arg2, %c0_i32 : i32
    %1 = arith.extui %0 : i1 to i32
    %c0_i32_0 = arith.constant 0 : i32
    %2 = arith.cmpi ne, %1, %c0_i32_0 : i32
    scf.if %2 {
      %cst_10 = arith.constant 0.000000e+00 : f32
      %12 = vector.broadcast %cst_10 : f32 to vector<16x64xf32>
      %c0_11 = arith.constant 0 : index
      %c0_12 = arith.constant 0 : index
      %13 = vector.load %arg6[%c0_11, %c0_12] : memref<16x64xf32, #tpu.memory_space<vmem>>, vector<16x64xf32>
      tpu.vector_store %arg6[%c0_11, %c0_12], %12 {strides = array<i32>} : memref<16x64xf32, #tpu.memory_space<vmem>>, vector<16x64xf32>,
    } else {
    }
    %c0 = arith.constant 0 : index
    %c0_1 = arith.constant 0 : index
    %3 = vector.load %arg6[%c0, %c0_1] : memref<16x64xf32, #tpu.memory_space<vmem>>, vector<16x64xf32>
    %c0_2 = arith.constant 0 : index
    %c0_3 = arith.constant 0 : index
    %4 = vector.load %arg3[%c0_2, %c0_3] : memref<16x32xf32, #tpu.memory_space<vmem>>, vector<16x32xf32>
    %c0_4 = arith.constant 0 : index
    %c0_5 = arith.constant 0 : index
    %5 = vector.load %arg4[%c0_4, %c0_5] : memref<64x32xf32, #tpu.memory_space<vmem>>, vector<64x32xf32>
    %cst = arith.constant dense<0.000000e+00> : vector<16x64xf32>
    %6 = tpu.matmul %4, %5, %cst {dimension_numbers = #tpu.dot_dimension_numbers<[1], [1], [0], [0], [0, 0, 1, 0], [], []>} : vector<16x32xf32>, vector<64x32xf32>, vector<16x64xf32> -> vector<16x64xf32>
    %7 = arith.addf %3, %6 : vector<16x64xf32>
    %c0_6 = arith.constant 0 : index
    %c0_7 = arith.constant 0 : index
    %8 = vector.load %arg6[%c0_6, %c0_7] : memref<16x64xf32, #tpu.memory_space<vmem>>, vector<16x64xf32>
    tpu.vector_store %arg6[%c0_6, %c0_7], %7 {strides = array<i32>} : memref<16x64xf32, #tpu.memory_space<vmem>>, vector<16x64xf32>,
    %c0_i32_8 = arith.constant 0 : i32
    %9 = arith.cmpi eq, %arg2, %c0_i32_8 : i32
    %10 = arith.extui %9 : i1 to i32
    %c0_i32_9 = arith.constant 0 : i32
    %11 = arith.cmpi ne, %10, %c0_i32_9 : i32
    scf.if %11 {
      %c0_10 = arith.constant 0 : index
      %c0_11 = arith.constant 0 : index
      %12 = vector.load %arg6[%c0_10, %c0_11] : memref<16x64xf32, #tpu.memory_space<vmem>>, vector<16x64xf32>
      %c0_12 = arith.constant 0 : index
      %c0_13 = arith.constant 0 : index
      %13 = vector.load %arg5[%c0_12, %c0_13] : memref<16x64xf32, #tpu.memory_space<vmem>>, vector<16x64xf32>
      tpu.vector_store %arg5[%c0_12, %c0_13], %12 {strides = array<i32>} : memref<16x64xf32, #tpu.memory_space<vmem>>, vector<16x64xf32>,
    } else {
    }
    return
  }
  func.func @transform_0(%arg0: i32, %arg1: i32, %arg2: i32) -> (i32, i32) {
    %c0_i32 = arith.constant 0 : i32
    return %arg0, %arg2 : i32, i32
  }
  func.func @transform_1(%arg0: i32, %arg1: i32, %arg2: i32) -> (i32, i32) {
    %c0_i32 = arith.constant 0 : i32
    return %arg1, %arg2 : i32, i32
  }
  func.func @transform_2(%arg0: i32, %arg1: i32, %arg2: i32) -> (i32, i32) {
    %c0_i32 = arith.constant 0 : i32
    return %arg0, %arg1 : i32, i32
  }
}

</mosaic_0001>

<llo_original>
// kernel: sonnet_forward.17
$region0: #{sonnet_forward.17}
  #allocation0 [shape = 'u32[]', space=smem, size = 0x4, offset = 0x4, fixed_abs, tag = 'smem constant byte address 0x4 - core index']
  #allocation1 [shape = 'u32[144,128]{1,0:T(1,128)}', space=vmem, size = 0x12000, scoped, tag = 'internal scratch']
  #allocation2 [shape = 'f32[16,96]{1,0:T(8,128)}', space=vmem, size = 0x2000, scoped, tag = 'scratch operand']
  %s0 = inlined_call_operand.vmem [shape: f32[16,32], index: 0, kind: input, shape index: {}]
  %s1 = inlined_call_operand.vmem [shape: f32[32,96], index: 1, kind: input, shape index: {}]
  %s2 = inlined_call_operand.vmem [shape: f32[1,96], index: 2, kind: input, shape index: {}]
  %s3 = inlined_call_operand.vmem [shape: f32[16,96], index: 3, kind: output, shape index: {}]
  %s4 = sld [smem:[#allocation0]]
  $region30: #{sonnet_forward.17} parent=0
    _
  %s6 = ssub.s32 1, %s4
  %s7 = scalar_select 0, %s6, %s4
  // Predicated region
  $region2: #{sonnet_forward.17} parent=0 // pred_check
    _
  $region3: #{sonnet_forward.17} parent=0 // pred_check_branch
    %9 = sbr.rel (0) target = $region5
  $region4: #{sonnet_forward.17} parent=0 // pred_region
    _
  $region5: #{sonnet_forward.17} parent=0 // pred_fallthru
    _
  // Predicated region
  $region6: #{sonnet_forward.17} parent=0 // pred_check
    _
  $region7: #{sonnet_forward.17} parent=0 // pred_check_branch
    %11 = sbr.rel (0) target = $region9
  $region8: #{sonnet_forward.17} parent=0 // pred_region
    _
  $region9: #{sonnet_forward.17} parent=0 // pred_fallthru
    _
  // Predicated region
  $region10: #{sonnet_forward.17} parent=0 // pred_check
    _
  $region11: #{sonnet_forward.17} parent=0 // pred_check_branch
    %13 = sbr.rel (0) target = $region13
  $region12: #{sonnet_forward.17} parent=0 // pred_region
    _
  $region13: #{sonnet_forward.17} parent=0 // pred_fallthru
    _
  %p14 = scmp.eq.s32.totalorder 0, 0
  // Predicated region
  $region14: #{sonnet_forward.17} parent=0 // pred_check
    %p15 = pneg %p14
  $region15: #{sonnet_forward.17} parent=0 // pred_check_branch
    %17 = sbr.rel (%p15) target = $region17
  $region16: #{sonnet_forward.17} parent=0 // pred_region
    %vm18 = vcmask 785408
    %19 = vst.msk [vmem:[#allocation2] sm:$0xff] %vm18, 0.0
    %20 = vst.msk [vmem:[#allocation2 + $0x8] sm:$0xff] %vm18, 0.0
  $region17: #{sonnet_forward.17} parent=0 // pred_fallthru
    _
  %v21 = vld [vmem:[#allocation2] sm:$0xff]
  %v22 = vld [vmem:[#allocation2 + $0x8] sm:$0xff]
  %v23 = vld [vmem:[%s0] sm:$0xff]
  %v24 = vld [vmem:[%s0 + $0x8] sm:$0xff]
  %v25 = vld [vmem:[%s1] sm:$0xff]
  %v26 = vld [vmem:[%s1 + $0x8] sm:$0xff]
  %v27 = vld [vmem:[%s1 + $0x10] sm:$0xff]
  %v28 = vld [vmem:[%s1 + $0x18] sm:$0xff]
  %vm29 = vcmask 261120
  %v31 = vsel %vm29, %v23, 0
  %v34 = vsel %vm29, %v24, 0
  %36 = vmatprep.subr.mxu0 0.0
  %37 = vmatpush1.msra.mxu0 %v25
  %38 = vmatprep.subr.mxu0 0.0
  %39 = vmatpush1.msra.mxu0 %v26
  %40 = vmatprep.subr.mxu0 0.0
  %41 = vmatpush1.msra.mxu0 %v27
  %42 = vmatprep.subr.mxu0 0.0
  %43 = vmatpush1.msra.mxu0 %v28
  %44 = vmatprep.subr.mxu0 0.0
  %45 = vmatpush1.msra.mxu0 0.0
  %46 = vmatprep.subr.mxu0 0.0
  %47 = vmatpush1.msra.mxu0 0.0
  %48 = vmatprep.subr.mxu0 0.0
  %49 = vmatpush1.msra.mxu0 0.0
  %50 = vmatprep.subr.mxu0 0.0
  %51 = vmatpush1.msra.mxu0 0.0
  %52 = vmatprep.subr.mxu0 0.0
  %53 = vmatpush1.msra.mxu0 0.0
  %54 = vmatprep.subr.mxu0 0.0
  %55 = vmatpush1.msra.mxu0 0.0
  %56 = vmatprep.subr.mxu0 0.0
  %57 = vmatpush1.msra.mxu0 0.0
  %58 = vmatprep.subr.mxu0 0.0
  %59 = vmatpush1.msra.mxu0 0.0
  %60 = vmatprep.subr.mxu0 0.0
  %61 = vmatpush1.msra.mxu0 0.0
  %62 = vmatprep.subr.mxu0 0.0
  %63 = vmatpush1.msra.mxu0 0.0
  %64 = vmatprep.subr.mxu0 0.0
  %65 = vmatpush1.msra.mxu0 0.0
  %66 = vmatprep.subr.mxu0 0.0
  %67 = vmatpush1.msra.mxu0 0.0
  %68 = vmatprep.subr.mxu0 0.0
  %69 = vmatpush1.msra.mxu0 0.0
  %70 = vmatprep.subr.mxu0 0.0
  %71 = vmatpush1.msra.mxu0 0.0
  %72 = vmatprep.subr.mxu0 0.0
  %73 = vmatpush1.msra.mxu0 0.0
  %74 = vmatprep.subr.mxu0 0.0
  %75 = vmatpush1.msra.mxu0 0.0
  %76 = vmatprep.subr.mxu0 0.0
  %77 = vmatpush1.msra.mxu0 0.0
  %78 = vmatprep.subr.mxu0 0.0
  %79 = vmatpush1.msra.mxu0 0.0
  %80 = vmatprep.subr.mxu0 0.0
  %81 = vmatpush1.msra.mxu0 0.0
  %82 = vmatprep.subr.mxu0 0.0
  %83 = vmatpush1.msra.mxu0 0.0
  %84 = vmatprep.subr.mxu0 0.0
  %85 = vmatpush1.msra.mxu0 0.0
  %86 = vmatprep.subr.mxu0 0.0
  %87 = vmatpush1.msra.mxu0 0.0
  %88 = vmatprep.subr.mxu0 0.0
  %89 = vmatpush1.msra.mxu0 0.0
  %90 = vmatprep.subr.mxu0 0.0
  %91 = vmatpush1.msra.mxu0 0.0
  %92 = vmatprep.subr.mxu0 0.0
  %93 = vmatpush1.msra.mxu0 0.0
  %94 = vmatprep.subr.mxu0 0.0
  %95 = vmatpush1.msra.mxu0 0.0
  %96 = vmatprep.subr.mxu0 0.0
  %97 = vmatpush1.msra.mxu0 0.0
  %98 = vmatprep.subr.mxu0 0.0
  %99 = vmatpush1.msra.mxu0 0.0
  %100 = vmatprep.mubr.f32.mxu0 0.0
  %101 = vmatmul.mubr.f32.gmra.mrb[0].mxu0 %v31
  %v102 = vpop.f32.mrb[0].mxu0
  %v103 = vadd.f32 0.0, %v102
  %v104 = vpop.f32.mrb[0].mxu0
  %105 = vmatprep.mubr.f32.mxu0 0.0
  %106 = vmatmul.mubr.f32.gmra.mrb[0].mxu0 %v34
  %v107 = vpop.f32.mrb[0].mxu0
  %v108 = vadd.f32 0.0, %v107
  %v109 = vpop.f32.mrb[0].mxu0
  %110 = vdwg.mxu0
  %v111 = vadd.f32 %v21, %v103
  %v112 = vadd.f32 %v22, %v108
  %vm113 = vcmask 785408
  %114 = vst.msk [vmem:[#allocation2] sm:$0xff] %vm113, %v111
  %115 = vst.msk [vmem:[#allocation2 + $0x8] sm:$0xff] %vm113, %v112
  // Predicated region
  $region18: #{sonnet_forward.17} parent=0 // pred_check
    %p116 = pneg %p14
  $region19: #{sonnet_forward.17} parent=0 // pred_check_branch
    %118 = sbr.rel (%p116) target = $region21
  $region20: #{sonnet_forward.17} parent=0 // pred_region
    %v119 = vld [vmem:[#allocation2] sm:$0xff]
    %v120 = vld [vmem:[#allocation2 + $0x8] sm:$0xff]
    %v121 = vld [vmem:[%s2] sm:$0x1]
    %v123 = vlaneseq
    %v124 = vshrl.u32 %v123, 7
    %v125 = vsub.s32 0, %v124
    %v126 = vrot.slane %v121, %v125
    %v128 = vadd.f32 %v119, %v126
    %v129 = vadd.f32 %v120, %v126
    %130 = vst.msk [vmem:[%s3] sm:$0xff] %vm113, %v128
    %131 = vst.msk [vmem:[%s3 + $0x8] sm:$0xff] %vm113, %v129
  $region21: #{sonnet_forward.17} parent=0 // pred_fallthru
    _
  // Predicated region
  $region22: #{sonnet_forward.17} parent=0 // pred_check
    _
  $region23: #{sonnet_forward.17} parent=0 // pred_check_branch
    %133 = sbr.rel (0) target = $region25
  $region24: #{sonnet_forward.17} parent=0 // pred_region
    _
  $region25: #{sonnet_forward.17} parent=0 // pred_fallthru
    _
  // Predicated region
  $region26: #{sonnet_forward.17} parent=0 // pred_check
    _
  $region27: #{sonnet_forward.17} parent=0 // pred_check_branch
    %135 = sbr.rel (0) target = $region29
  $region28: #{sonnet_forward.17} parent=0 // pred_region
    _
  $region29: #{sonnet_forward.17} parent=0 // pred_fallthru
    _

// kernel: sonnet_forward.19
$region0: #{sonnet_forward.19}
  #allocation0 [shape = 'u32[]', space=smem, size = 0x4, offset = 0x4, fixed_abs, tag = 'smem constant byte address 0x4 - core index']
  #allocation1 [shape = 'u32[144,128]{1,0:T(1,128)}', space=vmem, size = 0x12000, scoped, tag = 'internal scratch']
  #allocation2 [shape = 'f32[16,32]{1,0:T(8,128)}', space=vmem, size = 0x2000, scoped, tag = 'scratch operand']
  %s0 = inlined_call_operand.vmem [shape: f32[16,32], index: 0, kind: input, shape index: {}]
  %s1 = inlined_call_operand.vmem [shape: f32[32,32], index: 1, kind: input, shape index: {}]
  %s2 = inlined_call_operand.vmem [shape: f32[1,32], index: 2, kind: input, shape index: {}]
  %s3 = inlined_call_operand.vmem [shape: f32[16,32], index: 3, kind: input, shape index: {}]
  %s4 = inlined_call_operand.vmem [shape: f32[16,32], index: 4, kind: output, shape index: {}]
  %s5 = sld [smem:[#allocation0]]
  $region34: #{sonnet_forward.19} parent=0
    _
  %s7 = ssub.s32 1, %s5
  %s8 = scalar_select 0, %s7, %s5
  // Predicated region
  $region2: #{sonnet_forward.19} parent=0 // pred_check
    _
  $region3: #{sonnet_forward.19} parent=0 // pred_check_branch
    %10 = sbr.rel (0) target = $region5
  $region4: #{sonnet_forward.19} parent=0 // pred_region
    _
  $region5: #{sonnet_forward.19} parent=0 // pred_fallthru
    _
  // Predicated region
  $region6: #{sonnet_forward.19} parent=0 // pred_check
    _
  $region7: #{sonnet_forward.19} parent=0 // pred_check_branch
    %12 = sbr.rel (0) target = $region9
  $region8: #{sonnet_forward.19} parent=0 // pred_region
    _
  $region9: #{sonnet_forward.19} parent=0 // pred_fallthru
    _
  // Predicated region
  $region10: #{sonnet_forward.19} parent=0 // pred_check
    _
  $region11: #{sonnet_forward.19} parent=0 // pred_check_branch
    %14 = sbr.rel (0) target = $region13
  $region12: #{sonnet_forward.19} parent=0 // pred_region
    _
  $region13: #{sonnet_forward.19} parent=0 // pred_fallthru
    _
  // Predicated region
  $region14: #{sonnet_forward.19} parent=0 // pred_check
    _
  $region15: #{sonnet_forward.19} parent=0 // pred_check_branch
    %16 = sbr.rel (0) target = $region17
  $region16: #{sonnet_forward.19} parent=0 // pred_region
    _
  $region17: #{sonnet_forward.19} parent=0 // pred_fallthru
    _
  %p17 = scmp.eq.s32.totalorder 0, 0
  // Predicated region
  $region18: #{sonnet_forward.19} parent=0 // pred_check
    %p18 = pneg %p17
  $region19: #{sonnet_forward.19} parent=0 // pred_check_branch
    %20 = sbr.rel (%p18) target = $region21
  $region20: #{sonnet_forward.19} parent=0 // pred_region
    %vm21 = vcmask 261120
    %22 = vst.msk [vmem:[#allocation2] sm:$0xff] %vm21, 0.0
    %23 = vst.msk [vmem:[#allocation2 + $0x8] sm:$0xff] %vm21, 0.0
  $region21: #{sonnet_forward.19} parent=0 // pred_fallthru
    _
  %v24 = vld [vmem:[#allocation2] sm:$0xff]
  %v25 = vld [vmem:[#allocation2 + $0x8] sm:$0xff]
  %v26 = vld [vmem:[%s0] sm:$0xff]
  %v27 = vld [vmem:[%s0 + $0x8] sm:$0xff]
  %v28 = vld [vmem:[%s1] sm:$0xff]
  %v29 = vld [vmem:[%s1 + $0x8] sm:$0xff]
  %v30 = vld [vmem:[%s1 + $0x10] sm:$0xff]
  %v31 = vld [vmem:[%s1 + $0x18] sm:$0xff]
  %vm32 = vcmask 261120
  %v34 = vsel %vm32, %v26, 0
  %v37 = vsel %vm32, %v27, 0
  %39 = vmatprep.subr.mxu0 0.0
  %40 = vmatpush1.msra.mxu0 %v28
  %41 = vmatprep.subr.mxu0 0.0
  %42 = vmatpush1.msra.mxu0 %v29
  %43 = vmatprep.subr.mxu0 0.0
  %44 = vmatpush1.msra.mxu0 %v30
  %45 = vmatprep.subr.mxu0 0.0
  %46 = vmatpush1.msra.mxu0 %v31
  %47 = vmatprep.subr.mxu0 0.0
  %48 = vmatpush1.msra.mxu0 0.0
  %49 = vmatprep.subr.mxu0 0.0
  %50 = vmatpush1.msra.mxu0 0.0
  %51 = vmatprep.subr.mxu0 0.0
  %52 = vmatpush1.msra.mxu0 0.0
  %53 = vmatprep.subr.mxu0 0.0
  %54 = vmatpush1.msra.mxu0 0.0
  %55 = vmatprep.subr.mxu0 0.0
  %56 = vmatpush1.msra.mxu0 0.0
  %57 = vmatprep.subr.mxu0 0.0
  %58 = vmatpush1.msra.mxu0 0.0
  %59 = vmatprep.subr.mxu0 0.0
  %60 = vmatpush1.msra.mxu0 0.0
  %61 = vmatprep.subr.mxu0 0.0
  %62 = vmatpush1.msra.mxu0 0.0
  %63 = vmatprep.subr.mxu0 0.0
  %64 = vmatpush1.msra.mxu0 0.0
  %65 = vmatprep.subr.mxu0 0.0
  %66 = vmatpush1.msra.mxu0 0.0
  %67 = vmatprep.subr.mxu0 0.0
  %68 = vmatpush1.msra.mxu0 0.0
  %69 = vmatprep.subr.mxu0 0.0
  %70 = vmatpush1.msra.mxu0 0.0
  %71 = vmatprep.subr.mxu0 0.0
  %72 = vmatpush1.msra.mxu0 0.0
  %73 = vmatprep.subr.mxu0 0.0
  %74 = vmatpush1.msra.mxu0 0.0
  %75 = vmatprep.subr.mxu0 0.0
  %76 = vmatpush1.msra.mxu0 0.0
  %77 = vmatprep.subr.mxu0 0.0
  %78 = vmatpush1.msra.mxu0 0.0
  %79 = vmatprep.subr.mxu0 0.0
  %80 = vmatpush1.msra.mxu0 0.0
  %81 = vmatprep.subr.mxu0 0.0
  %82 = vmatpush1.msra.mxu0 0.0
  %83 = vmatprep.subr.mxu0 0.0
  %84 = vmatpush1.msra.mxu0 0.0
  %85 = vmatprep.subr.mxu0 0.0
  %86 = vmatpush1.msra.mxu0 0.0
  %87 = vmatprep.subr.mxu0 0.0
  %88 = vmatpush1.msra.mxu0 0.0
  %89 = vmatprep.subr.mxu0 0.0
  %90 = vmatpush1.msra.mxu0 0.0
  %91 = vmatprep.subr.mxu0 0.0
  %92 = vmatpush1.msra.mxu0 0.0
  %93 = vmatprep.subr.mxu0 0.0
  %94 = vmatpush1.msra.mxu0 0.0
  %95 = vmatprep.subr.mxu0 0.0
  %96 = vmatpush1.msra.mxu0 0.0
  %97 = vmatprep.subr.mxu0 0.0
  %98 = vmatpush1.msra.mxu0 0.0
  %99 = vmatprep.subr.mxu0 0.0
  %100 = vmatpush1.msra.mxu0 0.0
  %101 = vmatprep.subr.mxu0 0.0
  %102 = vmatpush1.msra.mxu0 0.0
  %103 = vmatprep.mubr.f32.mxu0 0.0
  %104 = vmatmul.mubr.f32.gmra.mrb[0].mxu0 %v34
  %v105 = vpop.f32.mrb[0].mxu0
  %v106 = vadd.f32 0.0, %v105
  %v107 = vpop.f32.mrb[0].mxu0
  %108 = vmatprep.mubr.f32.mxu0 0.0
  %109 = vmatmul.mubr.f32.gmra.mrb[0].mxu0 %v37
  %v110 = vpop.f32.mrb[0].mxu0
  %v111 = vadd.f32 0.0, %v110
  %v112 = vpop.f32.mrb[0].mxu0
  %113 = vdwg.mxu0
  %v114 = vadd.f32 %v24, %v106
  %v115 = vadd.f32 %v25, %v111
  %116 = vst.msk [vmem:[#allocation2] sm:$0xff] %vm32, %v114
  %117 = vst.msk [vmem:[#allocation2 + $0x8] sm:$0xff] %vm32, %v115
  // Predicated region
  $region22: #{sonnet_forward.19} parent=0 // pred_check
    %p118 = pneg %p17
  $region23: #{sonnet_forward.19} parent=0 // pred_check_branch
    %120 = sbr.rel (%p118) target = $region25
  $region24: #{sonnet_forward.19} parent=0 // pred_region
    %v121 = vld [vmem:[#allocation2] sm:$0xff]
    %v122 = vld [vmem:[#allocation2 + $0x8] sm:$0xff]
    %v123 = vld [vmem:[%s2] sm:$0x1]
    %v125 = vlaneseq
    %v126 = vshrl.u32 %v125, 7
    %v127 = vsub.s32 0, %v126
    %v128 = vrot.slane %v123, %v127
    %v130 = vadd.f32 %v121, %v128
    %v131 = vadd.f32 %v122, %v128
    %v132 = vld [vmem:[%s3] sm:$0xff]
    %v133 = vld [vmem:[%s3 + $0x8] sm:$0xff]
    %v134 = vadd.f32 %v130, %v132
    %v135 = vadd.f32 %v131, %v133
    %136 = vst.msk [vmem:[%s4] sm:$0xff] %vm32, %v134
    %137 = vst.msk [vmem:[%s4 + $0x8] sm:$0xff] %vm32, %v135
  $region25: #{sonnet_forward.19} parent=0 // pred_fallthru
    _
  // Predicated region
  $region26: #{sonnet_forward.19} parent=0 // pred_check
    _
  $region27: #{sonnet_forward.19} parent=0 // pred_check_branch
    %139 = sbr.rel (0) target = $region29
  $region28: #{sonnet_forward.19} parent=0 // pred_region
    _
  $region29: #{sonnet_forward.19} parent=0 // pred_fallthru
    _
  // Predicated region
  $region30: #{sonnet_forward.19} parent=0 // pred_check
    _
  $region31: #{sonnet_forward.19} parent=0 // pred_check_branch
    %141 = sbr.rel (0) target = $region33
  $region32: #{sonnet_forward.19} parent=0 // pred_region
    _
  $region33: #{sonnet_forward.19} parent=0 // pred_fallthru
    _

// kernel: sonnet_forward.16
$region0: #{sonnet_forward.16}
  #allocation0 [shape = 'u32[]', space=smem, size = 0x4, offset = 0x4, fixed_abs, tag = 'smem constant byte address 0x4 - core index']
  #allocation1 [shape = 'u32[144,128]{1,0:T(1,128)}', space=vmem, size = 0x12000, scoped, tag = 'internal scratch']
  %s0 = inlined_call_operand.vmem [shape: f32[16,32], index: 0, kind: input, shape index: {}]
  %s1 = inlined_call_operand.vmem [shape: f32[1,32], index: 1, kind: input, shape index: {}]
  %s2 = inlined_call_operand.vmem [shape: f32[1,32], index: 2, kind: input, shape index: {}]
  %s3 = inlined_call_operand.vmem [shape: f32[1,32], index: 3, kind: input, shape index: {}]
  %s4 = inlined_call_operand.vmem [shape: f32[16,32], index: 4, kind: output, shape index: {}]
  %s5 = sld [smem:[#allocation0]]
  $region26: #{sonnet_forward.16} parent=0
    _
  %s7 = ssub.s32 1, %s5
  %s8 = scalar_select 0, %s7, %s5
  // Predicated region
  $region2: #{sonnet_forward.16} parent=0 // pred_check
    _
  $region3: #{sonnet_forward.16} parent=0 // pred_check_branch
    %10 = sbr.rel (0) target = $region5
  $region4: #{sonnet_forward.16} parent=0 // pred_region
    _
  $region5: #{sonnet_forward.16} parent=0 // pred_fallthru
    _
  // Predicated region
  $region6: #{sonnet_forward.16} parent=0 // pred_check
    _
  $region7: #{sonnet_forward.16} parent=0 // pred_check_branch
    %12 = sbr.rel (0) target = $region9
  $region8: #{sonnet_forward.16} parent=0 // pred_region
    _
  $region9: #{sonnet_forward.16} parent=0 // pred_fallthru
    _
  // Predicated region
  $region10: #{sonnet_forward.16} parent=0 // pred_check
    _
  $region11: #{sonnet_forward.16} parent=0 // pred_check_branch
    %14 = sbr.rel (0) target = $region13
  $region12: #{sonnet_forward.16} parent=0 // pred_region
    _
  $region13: #{sonnet_forward.16} parent=0 // pred_fallthru
    _
  // Predicated region
  $region14: #{sonnet_forward.16} parent=0 // pred_check
    _
  $region15: #{sonnet_forward.16} parent=0 // pred_check_branch
    %16 = sbr.rel (0) target = $region17
  $region16: #{sonnet_forward.16} parent=0 // pred_region
    _
  $region17: #{sonnet_forward.16} parent=0 // pred_fallthru
    _
  %v17 = vld [vmem:[%s0] sm:$0xff]
  %v18 = vld [vmem:[%s0 + $0x8] sm:$0xff]
  %vm19 = vcmask 261120
  %v20 = vsel %vm19, %v17, 0.0
  %21 = vadd.xlane.f32.xlu0 %v20
  %v22 = vpop.xlane.xlu0 %21
  %v23 = vsel %vm19, %v18, 0.0
  %24 = vadd.xlane.f32.xlu0 %v23
  %v25 = vpop.xlane.xlu0 %24
  %v26 = vrcp.pop 32.0
  %v27 = vmul.f32 %v22, %v26
  %v28 = vmul.f32 %v25, %v26
  %v29 = vsub.f32 %v17, %v27
  %v30 = vsub.f32 %v18, %v28
  %v31 = vmul.f32 %v29, %v29
  %v32 = vmul.f32 %v30, %v30
  %v33 = vsel %vm19, %v31, 0.0
  %34 = vadd.xlane.f32.xlu0 %v33
  %v35 = vpop.xlane.xlu0 %34
  %v36 = vsel %vm19, %v32, 0.0
  %37 = vadd.xlane.f32.xlu0 %v36
  %v38 = vpop.xlane.xlu0 %37
  %v39 = vmul.f32 %v35, %v26
  %v40 = vmul.f32 %v38, %v26
  %v41 = vadd.f32 %v39, 1e-05
  %v42 = vadd.f32 %v40, 1e-05
  %v43 = vrsqrt.pop %v41
  %v44 = vrsqrt.pop %v42
  %v45 = vmul.f32 %v29, %v43
  %v46 = vmul.f32 %v30, %v44
  %v47 = vld [vmem:[%s1] sm:$0x1]
  %v49 = vlaneseq
  %v50 = vshrl.u32 %v49, 7
  %v51 = vsub.s32 0, %v50
  %v52 = vrot.slane %v47, %v51
  %v54 = vmul.f32 %v45, %v52
  %v55 = vmul.f32 %v46, %v52
  %v56 = vld [vmem:[%s2] sm:$0x1]
  %v58 = vlaneseq
  %v59 = vshrl.u32 %v58, 7
  %v60 = vsub.s32 0, %v59
  %v61 = vrot.slane %v56, %v60
  %v63 = vadd.f32 %v54, %v61
  %v64 = vadd.f32 %v55, %v61
  %v65 = vld [vmem:[%s3] sm:$0x1]
  %v67 = vlaneseq
  %v68 = vshrl.u32 %v67, 7
  %v69 = vsub.s32 0, %v68
  %v70 = vrot.slane %v65, %v69
  %v72 = vadd.f32 %v63, %v70
  %v73 = vadd.f32 %v64, %v70
  %74 = vst.msk [vmem:[%s4] sm:$0xff] %vm19, %v72
  %75 = vst.msk [vmem:[%s4 + $0x8] sm:$0xff] %vm19, %v73
  // Predicated region
  $region18: #{sonnet_forward.16} parent=0 // pred_check
    _
  $region19: #{sonnet_forward.16} parent=0 // pred_check_branch
    %77 = sbr.rel (0) target = $region21
  $region20: #{sonnet_forward.16} parent=0 // pred_region
    _
  $region21: #{sonnet_forward.16} parent=0 // pred_fallthru
    _
  // Predicated region
  $region22: #{sonnet_forward.16} parent=0 // pred_check
    _
  $region23: #{sonnet_forward.16} parent=0 // pred_check_branch
    %79 = sbr.rel (0) target = $region25
  $region24: #{sonnet_forward.16} parent=0 // pred_region
    _
  $region25: #{sonnet_forward.16} parent=0 // pred_fallthru
    _

// kernel: sonnet_forward.18
$region0: #{sonnet_forward.18}
  #allocation0 [shape = 'u32[]', space=smem, size = 0x4, offset = 0x4, fixed_abs, tag = 'smem constant byte address 0x4 - core index']
  #allocation1 [shape = 'u32[144,128]{1,0:T(1,128)}', space=vmem, size = 0x12000, scoped, tag = 'internal scratch']
  %s0 = inlined_call_operand.vmem [shape: f32[2,8,3,2,16], index: 0, kind: input, shape index: {}, may-alias: {0,1,2}]
  %s1 = inlined_call_operand.vmem [shape: f32[2,8,3,2,16], index: 1, kind: input, shape index: {}, may-alias: {0,1,2}]
  %s2 = inlined_call_operand.vmem [shape: f32[2,8,3,2,16], index: 2, kind: input, shape index: {}, may-alias: {0,1,2}]
  %s3 = inlined_call_operand.vmem [shape: f32[2,1,8], index: 3, kind: input, shape index: {}]
  %s4 = inlined_call_operand.vmem [shape: f32[2,8,32], index: 4, kind: output, shape index: {}]
  %s5 = sld [smem:[#allocation0]]
  $region172: #{sonnet_forward.18} parent=0
    _
  %s7 = ssub.s32 1, %s5
  %s8 = scalar_select 0, %s7, %s5
  $region1: #{sonnet_forward.18} parent=0
    #allocation2 [shape = 'u8[16384]{0}', space=vmem, size = 0x4000, scoped, tag = 'input window, operand 0']
    #allocation3 [shape = 'u8[16384]{0}', space=vmem, size = 0x4000, scoped, tag = 'input window, operand 1']
    #allocation4 [shape = 'u8[16384]{0}', space=vmem, size = 0x4000, scoped, tag = 'input window, operand 2']
    loop: start=0, step=1, limit=4
    $region2: #{sonnet_forward.18} parent=1 // loop_pre_header
      _
    $region3: #{sonnet_forward.18} parent=1 // loop_header
      %s10 = sphi 0, %s14
      %p11 = scmp.ge.s32.totalorder %s10, 4
      %s20 = sphi 0, %s22
      %s23 = sphi 0, %s20
      %s24 = sphi 0, %s23
      %s40 = sphi 0, %s24
      %s46 = sphi 0, %s48
      %s49 = sphi 0, %s46
      %s50 = sphi 0, %s49
      %s66 = sphi 0, %s50
      %s72 = sphi 0, %s74
      %s75 = sphi 0, %s72
      %s76 = sphi 0, %s75
      %s92 = sphi 0, %s76
      %s98 = sphi 0, %s100
      %s101 = sphi 0, %s98
      %s102 = sphi 0, %s101
      %s118 = sphi 0, %s102
      %s124 = sphi 0, %s126
      %s127 = sphi 0, %s124
      %s128 = sphi 0, %s127
      %s144 = sphi 0, %s128
    $region4: #{sonnet_forward.18} parent=1 // loop_header_branch
      %13 = sbr.rel (%p11) target = $region8
    $region5: #{sonnet_forward.18} parent=1 // loop_body
      %s15 = ssub.s32 %s10, 1
      %s16 = ssub.s32 %s10, 2
      %s17 = sadd.s32 %s10, 1
      %s18 = ssub.s32 %s10, %s17
      %p19 = scmp.eq.s32.totalorder %s18, 0
      %s21 = sadd.s32 %s20, 1
      %s22 = scalar_select %p19, %s20, %s21
      %p25 = pneg %p19
      %p26 = scmp.eq.s32.totalorder %s10, 1
      %p27 = por %p25, %p26
      %p28 = scmp.ne.s32.totalorder %s20, %s23
      %p29 = scmp.eq.s32.totalorder %s10, 0
      %p30 = por %p28, %p29
      %p31 = scmp.ne.s32.totalorder %s20, %s23
      %p32 = scmp.eq.s32.totalorder %s15, 1
      %p33 = por %p31, %p32
      %p34 = scmp.ne.s32.totalorder %s23, %s24
      %p35 = scmp.eq.s32.totalorder %s15, 0
      %p36 = por %p34, %p35
      %p37 = scmp.ne.s32.totalorder %s23, %s24
      %p38 = scmp.eq.s32.totalorder %s16, 1
      %p39 = por %p37, %p38
      %p41 = scmp.ne.s32.totalorder %s24, %s40
      %p42 = scmp.eq.s32.totalorder %s16, 0
      %p43 = por %p41, %p42
      %s44 = ssub.s32 %s10, %s17
      %p45 = scmp.eq.s32.totalorder %s44, 0
      %s47 = sadd.s32 %s46, 1
      %s48 = scalar_select %p45, %s46, %s47
      %p51 = pneg %p45
      %p52 = scmp.eq.s32.totalorder %s10, 1
      %p53 = por %p51, %p52
      %p54 = scmp.ne.s32.totalorder %s46, %s49
      %p55 = scmp.eq.s32.totalorder %s10, 0
      %p56 = por %p54, %p55
      %p57 = scmp.ne.s32.totalorder %s46, %s49
      %p58 = scmp.eq.s32.totalorder %s15, 1
      %p59 = por %p57, %p58
      %p60 = scmp.ne.s32.totalorder %s49, %s50
      %p61 = scmp.eq.s32.totalorder %s15, 0
      %p62 = por %p60, %p61
      %p63 = scmp.ne.s32.totalorder %s49, %s50
      %p64 = scmp.eq.s32.totalorder %s16, 1
      %p65 = por %p63, %p64
      %p67 = scmp.ne.s32.totalorder %s50, %s66
      %p68 = scmp.eq.s32.totalorder %s16, 0
      %p69 = por %p67, %p68
      %s70 = ssub.s32 %s10, %s17
      %p71 = scmp.eq.s32.totalorder %s70, 0
      %s73 = sadd.s32 %s72, 1
      %s74 = scalar_select %p71, %s72, %s73
      %p77 = pneg %p71
      %p78 = scmp.eq.s32.totalorder %s10, 1
      %p79 = por %p77, %p78
      %p80 = scmp.ne.s32.totalorder %s72, %s75
      %p81 = scmp.eq.s32.totalorder %s10, 0
      %p82 = por %p80, %p81
      %p83 = scmp.ne.s32.totalorder %s72, %s75
      %p84 = scmp.eq.s32.totalorder %s15, 1
      %p85 = por %p83, %p84
      %p86 = scmp.ne.s32.totalorder %s75, %s76
      %p87 = scmp.eq.s32.totalorder %s15, 0
      %p88 = por %p86, %p87
      %p89 = scmp.ne.s32.totalorder %s75, %s76
      %p90 = scmp.eq.s32.totalorder %s16, 1
      %p91 = por %p89, %p90
      %p93 = scmp.ne.s32.totalorder %s76, %s92
      %p94 = scmp.eq.s32.totalorder %s16, 0
      %p95 = por %p93, %p94
      %s96 = ssub.s32 %s10, %s17
      %p97 = scmp.eq.s32.totalorder %s96, 0
      %s99 = sadd.s32 %s98, 1
      %s100 = scalar_select %p97, %s98, %s99
      %p103 = pneg %p97
      %p104 = scmp.eq.s32.totalorder %s10, 1
      %p105 = por %p103, %p104
      %p106 = scmp.ne.s32.totalorder %s98, %s101
      %p107 = scmp.eq.s32.totalorder %s10, 0
      %p108 = por %p106, %p107
      %p109 = scmp.ne.s32.totalorder %s98, %s101
      %p110 = scmp.eq.s32.totalorder %s15, 1
      %p111 = por %p109, %p110
      %p112 = scmp.ne.s32.totalorder %s101, %s102
      %p113 = scmp.eq.s32.totalorder %s15, 0
      %p114 = por %p112, %p113
      %p115 = scmp.ne.s32.totalorder %s101, %s102
      %p116 = scmp.eq.s32.totalorder %s16, 1
      %p117 = por %p115, %p116
      %p119 = scmp.ne.s32.totalorder %s102, %s118
      %p120 = scmp.eq.s32.totalorder %s16, 0
      %p121 = por %p119, %p120
      %s122 = ssub.s32 %s10, %s17
      %p123 = scmp.eq.s32.totalorder %s122, 0
      %s125 = sadd.s32 %s124, 1
      %s126 = scalar_select %p123, %s124, %s125
      %p129 = pneg %p123
      %p130 = scmp.eq.s32.totalorder %s10, 1
      %p131 = por %p129, %p130
      %p132 = scmp.ne.s32.totalorder %s124, %s127
      %p133 = scmp.eq.s32.totalorder %s10, 0
      %p134 = por %p132, %p133
      %p135 = scmp.ne.s32.totalorder %s124, %s127
      %p136 = scmp.eq.s32.totalorder %s15, 1
      %p137 = por %p135, %p136
      %p138 = scmp.ne.s32.totalorder %s127, %s128
      %p139 = scmp.eq.s32.totalorder %s15, 0
      %p140 = por %p138, %p139
      %p141 = scmp.ne.s32.totalorder %s127, %s128
      %p142 = scmp.eq.s32.totalorder %s16, 1
      %p143 = por %p141, %p142
      %p145 = scmp.ne.s32.totalorder %s128, %s144
      %p146 = scmp.eq.s32.totalorder %s16, 0
      %p147 = por %p145, %p146
      %p148 = scmp.le.s32.totalorder 1, %s10
      %p149 = scmp.lt.s32.totalorder %s10, 3
      %p150 = pnand %p148, %p149
      %p151 = pneg %p150
      // Predicated region
      $region9: #{sonnet_forward.18} parent=5 // pred_check
        _
      $region10: #{sonnet_forward.18} parent=5 // pred_check_branch
        %153 = sbr.rel (%p150) target = $region12
      $region11: #{sonnet_forward.18} parent=5 // pred_region
        %s154 = ssub.s32 %s10, 1
      $region12: #{sonnet_forward.18} parent=5 // pred_fallthru
        _
      %p155 = scmp.lt.s32.totalorder %s10, 2
      // Predicated region
      $region13: #{sonnet_forward.18} parent=5 // pred_check
        %p156 = pneg %p155
      $region14: #{sonnet_forward.18} parent=5 // pred_check_branch
        %158 = sbr.rel (%p156) target = $region16
      $region15: #{sonnet_forward.18} parent=5 // pred_region
        // Predicated region
        $region17: #{sonnet_forward.18} parent=15 // pred_check
          %p159 = pneg %p30
        $region18: #{sonnet_forward.18} parent=15 // pred_check_branch
          %161 = sbr.rel (%p159) target = $region20
        $region19: #{sonnet_forward.18} parent=15 // pred_region
          %s162 = sand.u32 %s20, 1
          %s163 = sand.u32 %s20, 1
          %s164 = smul.addr %s163, 16
          %s165 = scalar_lea.vmem [#allocation2], %s164
          %s166 = smul.addr %s10, 24
          %s167 = smul.addr %s166, 2
          %s168 = scalar_lea.vmem %s0, %s167
          // Predicated region
          $region21: #{sonnet_forward.18} parent=19 // pred_check
            _
          $region22: #{sonnet_forward.18} parent=19 // pred_check_branch
            %170 = sbr.rel (0) target = $region24
          $region23: #{sonnet_forward.18} parent=19 // pred_region
            // Predicated region
            $region25: #{sonnet_forward.18} parent=23 // pred_check
              _
            $region26: #{sonnet_forward.18} parent=23 // pred_check_branch
              %172 = sbr.rel target = $region28
            $region27: #{sonnet_forward.18} parent=23 // pred_region
              // Predicated region
              $region40: #{sonnet_forward.18} parent=27 // pred_check
                _
              $region41: #{sonnet_forward.18} parent=27 // pred_check_branch
                %201 = sbr.rel (0) target = $region43
              $region42: #{sonnet_forward.18} parent=27 // pred_region
                loop: start=0, step=1, limit=1
                $region44: #{sonnet_forward.18} parent=42 // loop_pre_header
                  _
                $region45: #{sonnet_forward.18} parent=42 // loop_header
                  %s203 = sphi 0, %s207
                  %p204 = scmp.ge.s32.totalorder %s203, 1
                  %s208 = sphi %s168, %s168
                  %s209 = sphi %s165, %s165
                $region46: #{sonnet_forward.18} parent=42 // loop_header_branch
                  %206 = sbr.rel (%p204) target = $region50
                $region47: #{sonnet_forward.18} parent=42 // loop_body
                  _
                $region48: #{sonnet_forward.18} parent=42 // loop_footer
                  %s207 = sadd.s32 1, %s203
                $region49: #{sonnet_forward.18} parent=42 // loop_footer_branch
                  %202 = sbr.rel target = $region45
                $region50: #{sonnet_forward.18} parent=42 // loop_exit
                  _
                loop: start=0, step=1, limit=1
                $region51: #{sonnet_forward.18} parent=42 // loop_pre_header
                  _
                $region52: #{sonnet_forward.18} parent=42 // loop_header
                  %s212 = sphi 0, %s216
                  %p213 = scmp.ge.s32.totalorder %s212, 1
                  %s217 = sphi %s168, %s168
                  %s218 = sphi %s165, %s165
                $region53: #{sonnet_forward.18} parent=42 // loop_header_branch
                  %215 = sbr.rel (%p213) target = $region57
                $region54: #{sonnet_forward.18} parent=42 // loop_body
                  %v219 = vld [vmem:[%s217] sm:$0x3]
                  %220 = vst [vmem:[%s218] sm:$0x3] %v219
                  %v221 = vld [vmem:[%s217 + $0x6] sm:$0x3]
                  %222 = vst [vmem:[%s218 + $0x2] sm:$0x3] %v221
                  %v223 = vld [vmem:[%s217 + $0xc] sm:$0x3]
                  %224 = vst [vmem:[%s218 + $0x4] sm:$0x3] %v223
                  %v225 = vld [vmem:[%s217 + $0x12] sm:$0x3]
                  %226 = vst [vmem:[%s218 + $0x6] sm:$0x3] %v225
                  %v227 = vld [vmem:[%s217 + $0x18] sm:$0x3]
                  %228 = vst [vmem:[%s218 + $0x8] sm:$0x3] %v227
                  %v229 = vld [vmem:[%s217 + $0x1e] sm:$0x3]
                  %230 = vst [vmem:[%s218 + $0xa] sm:$0x3] %v229
                  %v231 = vld [vmem:[%s217 + $0x24] sm:$0x3]
                  %232 = vst [vmem:[%s218 + $0xc] sm:$0x3] %v231
                  %v233 = vld [vmem:[%s217 + $0x2a] sm:$0x3]
                  %234 = vst [vmem:[%s218 + $0xe] sm:$0x3] %v233
                $region55: #{sonnet_forward.18} parent=42 // loop_footer
                  %s216 = sadd.s32 1, %s212
                $region56: #{sonnet_forward.18} parent=42 // loop_footer_branch
                  %211 = sbr.rel target = $region52
                $region57: #{sonnet_forward.18} parent=42 // loop_exit
                  _
              $region43: #{sonnet_forward.18} parent=27 // pred_fallthru
                _
            $region28: #{sonnet_forward.18} parent=23 // pred_fallthru
              _
            // Predicated region
            $region29: #{sonnet_forward.18} parent=23 // pred_check
              _
            $region30: #{sonnet_forward.18} parent=23 // pred_check_branch
              %174 = sbr.rel (0) target = $region32
            $region31: #{sonnet_forward.18} parent=23 // pred_region
              loop: start=0, step=1, limit=1
              $region33: #{sonnet_forward.18} parent=31 // loop_pre_header
                _
              $region34: #{sonnet_forward.18} parent=31 // loop_header
                %s177 = sphi 0, %s181
                %p178 = scmp.ge.s32.totalorder %s177, 1
                %s182 = sphi %s168, %s168
                %s183 = sphi %s165, %s165
              $region35: #{sonnet_forward.18} parent=31 // loop_header_branch
                %180 = sbr.rel (%p178) target = $region39
              $region36: #{sonnet_forward.18} parent=31 // loop_body
                %v184 = vld [vmem:[%s182] sm:$0x3]
                %185 = vst [vmem:[%s183] sm:$0x3] %v184
                %v186 = vld [vmem:[%s182 + $0x6] sm:$0x3]
                %187 = vst [vmem:[%s183 + $0x2] sm:$0x3] %v186
                %v188 = vld [vmem:[%s182 + $0xc] sm:$0x3]
                %189 = vst [vmem:[%s183 + $0x4] sm:$0x3] %v188
                %v190 = vld [vmem:[%s182 + $0x12] sm:$0x3]
                %191 = vst [vmem:[%s183 + $0x6] sm:$0x3] %v190
                %v192 = vld [vmem:[%s182 + $0x18] sm:$0x3]
                %193 = vst [vmem:[%s183 + $0x8] sm:$0x3] %v192
                %v194 = vld [vmem:[%s182 + $0x1e] sm:$0x3]
                %195 = vst [vmem:[%s183 + $0xa] sm:$0x3] %v194
                %v196 = vld [vmem:[%s182 + $0x24] sm:$0x3]
                %197 = vst [vmem:[%s183 + $0xc] sm:$0x3] %v196
                %v198 = vld [vmem:[%s182 + $0x2a] sm:$0x3]
                %199 = vst [vmem:[%s183 + $0xe] sm:$0x3] %v198
              $region37: #{sonnet_forward.18} parent=31 // loop_footer
                %s181 = sadd.s32 1, %s177
              $region38: #{sonnet_forward.18} parent=31 // loop_footer_branch
                %176 = sbr.rel target = $region34
              $region39: #{sonnet_forward.18} parent=31 // loop_exit
                _
            $region32: #{sonnet_forward.18} parent=23 // pred_fallthru
              _
          $region24: #{sonnet_forward.18} parent=19 // pred_fallthru
            _
          %235 = vnop
        $region20: #{sonnet_forward.18} parent=15 // pred_fallthru
          _
        // Predicated region
        $region58: #{sonnet_forward.18} parent=15 // pred_check
          %p236 = pneg %p56
        $region59: #{sonnet_forward.18} parent=15 // pred_check_branch
          %238 = sbr.rel (%p236) target = $region61
        $region60: #{sonnet_forward.18} parent=15 // pred_region
          %s239 = sand.u32 %s46, 1
          %s240 = sand.u32 %s46, 1
          %s241 = smul.addr %s240, 16
          %s242 = scalar_lea.vmem [#allocation3], %s241
          %s243 = smul.addr %s10, 24
          %s244 = sadd.s32 1, %s243
          %s245 = smul.addr %s244, 2
          %s246 = scalar_lea.vmem %s1, %s245
          // Predicated region
          $region62: #{sonnet_forward.18} parent=60 // pred_check
            _
          $region63: #{sonnet_forward.18} parent=60 // pred_check_branch
            %248 = sbr.rel (0) target = $region65
          $region64: #{sonnet_forward.18} parent=60 // pred_region
            // Predicated region
            $region66: #{sonnet_forward.18} parent=64 // pred_check
              _
            $region67: #{sonnet_forward.18} parent=64 // pred_check_branch
              %250 = sbr.rel target = $region69
            $region68: #{sonnet_forward.18} parent=64 // pred_region
              // Predicated region
              $region81: #{sonnet_forward.18} parent=68 // pred_check
                _
              $region82: #{sonnet_forward.18} parent=68 // pred_check_branch
                %279 = sbr.rel (0) target = $region84
              $region83: #{sonnet_forward.18} parent=68 // pred_region
                loop: start=0, step=1, limit=1
                $region85: #{sonnet_forward.18} parent=83 // loop_pre_header
                  _
                $region86: #{sonnet_forward.18} parent=83 // loop_header
                  %s281 = sphi 0, %s285
                  %p282 = scmp.ge.s32.totalorder %s281, 1
                  %s286 = sphi %s246, %s246
                  %s287 = sphi %s242, %s242
                $region87: #{sonnet_forward.18} parent=83 // loop_header_branch
                  %284 = sbr.rel (%p282) target = $region91
                $region88: #{sonnet_forward.18} parent=83 // loop_body
                  _
                $region89: #{sonnet_forward.18} parent=83 // loop_footer
                  %s285 = sadd.s32 1, %s281
                $region90: #{sonnet_forward.18} parent=83 // loop_footer_branch
                  %280 = sbr.rel target = $region86
                $region91: #{sonnet_forward.18} parent=83 // loop_exit
                  _
                loop: start=0, step=1, limit=1
                $region92: #{sonnet_forward.18} parent=83 // loop_pre_header
                  _
                $region93: #{sonnet_forward.18} parent=83 // loop_header
                  %s290 = sphi 0, %s294
                  %p291 = scmp.ge.s32.totalorder %s290, 1
                  %s295 = sphi %s246, %s246
                  %s296 = sphi %s242, %s242
                $region94: #{sonnet_forward.18} parent=83 // loop_header_branch
                  %293 = sbr.rel (%p291) target = $region98
                $region95: #{sonnet_forward.18} parent=83 // loop_body
                  %v297 = vld [vmem:[%s295] sm:$0x3]
                  %298 = vst [vmem:[%s296] sm:$0x3] %v297
                  %v299 = vld [vmem:[%s295 + $0x6] sm:$0x3]
                  %300 = vst [vmem:[%s296 + $0x2] sm:$0x3] %v299
                  %v301 = vld [vmem:[%s295 + $0xc] sm:$0x3]
                  %302 = vst [vmem:[%s296 + $0x4] sm:$0x3] %v301
                  %v303 = vld [vmem:[%s295 + $0x12] sm:$0x3]
                  %304 = vst [vmem:[%s296 + $0x6] sm:$0x3] %v303
                  %v305 = vld [vmem:[%s295 + $0x18] sm:$0x3]
                  %306 = vst [vmem:[%s296 + $0x8] sm:$0x3] %v305
                  %v307 = vld [vmem:[%s295 + $0x1e] sm:$0x3]
                  %308 = vst [vmem:[%s296 + $0xa] sm:$0x3] %v307
                  %v309 = vld [vmem:[%s295 + $0x24] sm:$0x3]
                  %310 = vst [vmem:[%s296 + $0xc] sm:$0x3] %v309
                  %v311 = vld [vmem:[%s295 + $0x2a] sm:$0x3]
                  %312 = vst [vmem:[%s296 + $0xe] sm:$0x3] %v311
                $region96: #{sonnet_forward.18} parent=83 // loop_footer
                  %s294 = sadd.s32 1, %s290
                $region97: #{sonnet_forward.18} parent=83 // loop_footer_branch
                  %289 = sbr.rel target = $region93
                $region98: #{sonnet_forward.18} parent=83 // loop_exit
                  _
              $region84: #{sonnet_forward.18} parent=68 // pred_fallthru
                _
            $region69: #{sonnet_forward.18} parent=64 // pred_fallthru
              _
            // Predicated region
            $region70: #{sonnet_forward.18} parent=64 // pred_check
              _
            $region71: #{sonnet_forward.18} parent=64 // pred_check_branch
              %252 = sbr.rel (0) target = $region73
            $region72: #{sonnet_forward.18} parent=64 // pred_region
              loop: start=0, step=1, limit=1
              $region74: #{sonnet_forward.18} parent=72 // loop_pre_header
                _
              $region75: #{sonnet_forward.18} parent=72 // loop_header
                %s255 = sphi 0, %s259
                %p256 = scmp.ge.s32.totalorder %s255, 1
                %s260 = sphi %s246, %s246
                %s261 = sphi %s242, %s242
              $region76: #{sonnet_forward.18} parent=72 // loop_header_branch
                %258 = sbr.rel (%p256) target = $region80
              $region77: #{sonnet_forward.18} parent=72 // loop_body
                %v262 = vld [vmem:[%s260] sm:$0x3]
                %263 = vst [vmem:[%s261] sm:$0x3] %v262
                %v264 = vld [vmem:[%s260 + $0x6] sm:$0x3]
                %265 = vst [vmem:[%s261 + $0x2] sm:$0x3] %v264
                %v266 = vld [vmem:[%s260 + $0xc] sm:$0x3]
                %267 = vst [vmem:[%s261 + $0x4] sm:$0x3] %v266
                %v268 = vld [vmem:[%s260 + $0x12] sm:$0x3]
                %269 = vst [vmem:[%s261 + $0x6] sm:$0x3] %v268
                %v270 = vld [vmem:[%s260 + $0x18] sm:$0x3]
                %271 = vst [vmem:[%s261 + $0x8] sm:$0x3] %v270
                %v272 = vld [vmem:[%s260 + $0x1e] sm:$0x3]
                %273 = vst [vmem:[%s261 + $0xa] sm:$0x3] %v272
                %v274 = vld [vmem:[%s260 + $0x24] sm:$0x3]
                %275 = vst [vmem:[%s261 + $0xc] sm:$0x3] %v274
                %v276 = vld [vmem:[%s260 + $0x2a] sm:$0x3]
                %277 = vst [vmem:[%s261 + $0xe] sm:$0x3] %v276
              $region78: #{sonnet_forward.18} parent=72 // loop_footer
                %s259 = sadd.s32 1, %s255
              $region79: #{sonnet_forward.18} parent=72 // loop_footer_branch
                %254 = sbr.rel target = $region75
              $region80: #{sonnet_forward.18} parent=72 // loop_exit
                _
            $region73: #{sonnet_forward.18} parent=64 // pred_fallthru
              _
          $region65: #{sonnet_forward.18} parent=60 // pred_fallthru
            _
          %313 = vnop
        $region61: #{sonnet_forward.18} parent=15 // pred_fallthru
          _
        // Predicated region
        $region99: #{sonnet_forward.18} parent=15 // pred_check
          %p314 = pneg %p82
        $region100: #{sonnet_forward.18} parent=15 // pred_check_branch
          %316 = sbr.rel (%p314) target = $region102
        $region101: #{sonnet_forward.18} parent=15 // pred_region
          %s317 = sand.u32 %s72, 1
          %s318 = sand.u32 %s72, 1
          %s319 = smul.addr %s318, 16
          %s320 = scalar_lea.vmem [#allocation4], %s319
          %s321 = smul.addr %s10, 24
          %s322 = sadd.s32 2, %s321
          %s323 = smul.addr %s322, 2
          %s324 = scalar_lea.vmem %s2, %s323
          // Predicated region
          $region103: #{sonnet_forward.18} parent=101 // pred_check
            _
          $region104: #{sonnet_forward.18} parent=101 // pred_check_branch
            %326 = sbr.rel (0) target = $region106
          $region105: #{sonnet_forward.18} parent=101 // pred_region
            // Predicated region
            $region107: #{sonnet_forward.18} parent=105 // pred_check
              _
            $region108: #{sonnet_forward.18} parent=105 // pred_check_branch
              %328 = sbr.rel target = $region110
            $region109: #{sonnet_forward.18} parent=105 // pred_region
              // Predicated region
              $region122: #{sonnet_forward.18} parent=109 // pred_check
                _
              $region123: #{sonnet_forward.18} parent=109 // pred_check_branch
                %357 = sbr.rel (0) target = $region125
              $region124: #{sonnet_forward.18} parent=109 // pred_region
                loop: start=0, step=1, limit=1
                $region126: #{sonnet_forward.18} parent=124 // loop_pre_header
                  _
                $region127: #{sonnet_forward.18} parent=124 // loop_header
                  %s359 = sphi 0, %s363
                  %p360 = scmp.ge.s32.totalorder %s359, 1
                  %s364 = sphi %s324, %s324
                  %s365 = sphi %s320, %s320
                $region128: #{sonnet_forward.18} parent=124 // loop_header_branch
                  %362 = sbr.rel (%p360) target = $region132
                $region129: #{sonnet_forward.18} parent=124 // loop_body
                  _
                $region130: #{sonnet_forward.18} parent=124 // loop_footer
                  %s363 = sadd.s32 1, %s359
                $region131: #{sonnet_forward.18} parent=124 // loop_footer_branch
                  %358 = sbr.rel target = $region127
                $region132: #{sonnet_forward.18} parent=124 // loop_exit
                  _
                loop: start=0, step=1, limit=1
                $region133: #{sonnet_forward.18} parent=124 // loop_pre_header
                  _
                $region134: #{sonnet_forward.18} parent=124 // loop_header
                  %s368 = sphi 0, %s372
                  %p369 = scmp.ge.s32.totalorder %s368, 1
                  %s373 = sphi %s324, %s324
                  %s374 = sphi %s320, %s320
                $region135: #{sonnet_forward.18} parent=124 // loop_header_branch
                  %371 = sbr.rel (%p369) target = $region139
                $region136: #{sonnet_forward.18} parent=124 // loop_body
                  %v375 = vld [vmem:[%s373] sm:$0x3]
                  %376 = vst [vmem:[%s374] sm:$0x3] %v375
                  %v377 = vld [vmem:[%s373 + $0x6] sm:$0x3]
                  %378 = vst [vmem:[%s374 + $0x2] sm:$0x3] %v377
                  %v379 = vld [vmem:[%s373 + $0xc] sm:$0x3]
                  %380 = vst [vmem:[%s374 + $0x4] sm:$0x3] %v379
                  %v381 = vld [vmem:[%s373 + $0x12] sm:$0x3]
                  %382 = vst [vmem:[%s374 + $0x6] sm:$0x3] %v381
                  %v383 = vld [vmem:[%s373 + $0x18] sm:$0x3]
                  %384 = vst [vmem:[%s374 + $0x8] sm:$0x3] %v383
                  %v385 = vld [vmem:[%s373 + $0x1e] sm:$0x3]
                  %386 = vst [vmem:[%s374 + $0xa] sm:$0x3] %v385
                  %v387 = vld [vmem:[%s373 + $0x24] sm:$0x3]
                  %388 = vst [vmem:[%s374 + $0xc] sm:$0x3] %v387
                  %v389 = vld [vmem:[%s373 + $0x2a] sm:$0x3]
                  %390 = vst [vmem:[%s374 + $0xe] sm:$0x3] %v389
                $region137: #{sonnet_forward.18} parent=124 // loop_footer
                  %s372 = sadd.s32 1, %s368
                $region138: #{sonnet_forward.18} parent=124 // loop_footer_branch
                  %367 = sbr.rel target = $region134
                $region139: #{sonnet_forward.18} parent=124 // loop_exit
                  _
              $region125: #{sonnet_forward.18} parent=109 // pred_fallthru
                _
            $region110: #{sonnet_forward.18} parent=105 // pred_fallthru
              _
            // Predicated region
            $region111: #{sonnet_forward.18} parent=105 // pred_check
              _
            $region112: #{sonnet_forward.18} parent=105 // pred_check_branch
              %330 = sbr.rel (0) target = $region114
            $region113: #{sonnet_forward.18} parent=105 // pred_region
              loop: start=0, step=1, limit=1
              $region115: #{sonnet_forward.18} parent=113 // loop_pre_header
                _
              $region116: #{sonnet_forward.18} parent=113 // loop_header
                %s333 = sphi 0, %s337
                %p334 = scmp.ge.s32.totalorder %s333, 1
                %s338 = sphi %s324, %s324
                %s339 = sphi %s320, %s320
              $region117: #{sonnet_forward.18} parent=113 // loop_header_branch
                %336 = sbr.rel (%p334) target = $region121
              $region118: #{sonnet_forward.18} parent=113 // loop_body
                %v340 = vld [vmem:[%s338] sm:$0x3]
                %341 = vst [vmem:[%s339] sm:$0x3] %v340
                %v342 = vld [vmem:[%s338 + $0x6] sm:$0x3]
                %343 = vst [vmem:[%s339 + $0x2] sm:$0x3] %v342
                %v344 = vld [vmem:[%s338 + $0xc] sm:$0x3]
                %345 = vst [vmem:[%s339 + $0x4] sm:$0x3] %v344
                %v346 = vld [vmem:[%s338 + $0x12] sm:$0x3]
                %347 = vst [vmem:[%s339 + $0x6] sm:$0x3] %v346
                %v348 = vld [vmem:[%s338 + $0x18] sm:$0x3]
                %349 = vst [vmem:[%s339 + $0x8] sm:$0x3] %v348
                %v350 = vld [vmem:[%s338 + $0x1e] sm:$0x3]
                %351 = vst [vmem:[%s339 + $0xa] sm:$0x3] %v350
                %v352 = vld [vmem:[%s338 + $0x24] sm:$0x3]
                %353 = vst [vmem:[%s339 + $0xc] sm:$0x3] %v352
                %v354 = vld [vmem:[%s338 + $0x2a] sm:$0x3]
                %355 = vst [vmem:[%s339 + $0xe] sm:$0x3] %v354
              $region119: #{sonnet_forward.18} parent=113 // loop_footer
                %s337 = sadd.s32 1, %s333
              $region120: #{sonnet_forward.18} parent=113 // loop_footer_branch
                %332 = sbr.rel target = $region116
              $region121: #{sonnet_forward.18} parent=113 // loop_exit
                _
            $region114: #{sonnet_forward.18} parent=105 // pred_fallthru
              _
          $region106: #{sonnet_forward.18} parent=101 // pred_fallthru
            _
          %391 = vnop
        $region102: #{sonnet_forward.18} parent=15 // pred_fallthru
          _
        // Predicated region
        $region140: #{sonnet_forward.18} parent=15 // pred_check
          %p392 = pneg %p108
        $region141: #{sonnet_forward.18} parent=15 // pred_check_branch
          %394 = sbr.rel (%p392) target = $region143
        $region142: #{sonnet_forward.18} parent=15 // pred_region
          %p395 = scmp.lt.s32.totalorder %s10, 1
          %s396 = scalar_select %p395, %s10, 1
          %s397 = scalar_lea.vmem %s3, %s396
        $region143: #{sonnet_forward.18} parent=15 // pred_fallthru
          _
      $region16: #{sonnet_forward.18} parent=5 // pred_fallthru
        _
      %p398 = scmp.le.s32.totalorder 1, %s10
      %p399 = scmp.lt.s32.totalorder %s10, 3
      %p400 = pnand %p398, %p399
      %p401 = pneg %p400
      // Predicated region
      $region144: #{sonnet_forward.18} parent=5 // pred_check
        _
      $region145: #{sonnet_forward.18} parent=5 // pred_check_branch
        %403 = sbr.rel (%p400) target = $region147
      $region146: #{sonnet_forward.18} parent=5 // pred_region
        %s404 = ssub.s32 %s10, 1
        %s405 = sand.u32 %s23, 1
        %s406 = sand.u32 %s23, 1
        %s407 = smul.addr %s406, 16
        %s408 = scalar_lea.vmem [#allocation2], %s407
        // Predicated region
        $region148: #{sonnet_forward.18} parent=146 // pred_check
          %p409 = pneg %p36
        $region149: #{sonnet_forward.18} parent=146 // pred_check_branch
          %411 = sbr.rel (%p409) target = $region151
        $region150: #{sonnet_forward.18} parent=146 // pred_region
          _
        $region151: #{sonnet_forward.18} parent=146 // pred_fallthru
          _
        %s412 = sand.u32 %s49, 1
        %s413 = sand.u32 %s49, 1
        %s414 = smul.addr %s413, 16
        %s415 = scalar_lea.vmem [#allocation3], %s414
        // Predicated region
        $region152: #{sonnet_forward.18} parent=146 // pred_check
          %p416 = pneg %p62
        $region153: #{sonnet_forward.18} parent=146 // pred_check_branch
          %418 = sbr.rel (%p416) target = $region155
        $region154: #{sonnet_forward.18} parent=146 // pred_region
          _
        $region155: #{sonnet_forward.18} parent=146 // pred_fallthru
          _
        %s419 = sand.u32 %s75, 1
        %s420 = sand.u32 %s75, 1
        %s421 = smul.addr %s420, 16
        %s422 = scalar_lea.vmem [#allocation4], %s421
        // Predicated region
        $region156: #{sonnet_forward.18} parent=146 // pred_check
          %p423 = pneg %p88
        $region157: #{sonnet_forward.18} parent=146 // pred_check_branch
          %425 = sbr.rel (%p423) target = $region159
        $region158: #{sonnet_forward.18} parent=146 // pred_region
          _
        $region159: #{sonnet_forward.18} parent=146 // pred_fallthru
          _
        %s426 = sand.u32 %s23, 1
        %s427 = sand.u32 %s23, 1
        %s428 = smul.addr %s427, 16
        %s429 = scalar_lea.vmem [#allocation2], %s428
        %p430 = pneg %p36
        %p431 = pneg %p33
        %s432 = sand.u32 %s49, 1
        %s433 = sand.u32 %s49, 1
        %s434 = smul.addr %s433, 16
        %s435 = scalar_lea.vmem [#allocation3], %s434
        %p436 = pneg %p62
        %p437 = pneg %p59
        %s438 = sand.u32 %s75, 1
        %s439 = sand.u32 %s75, 1
        %s440 = smul.addr %s439, 16
        %s441 = scalar_lea.vmem [#allocation4], %s440
        %p442 = pneg %p88
        %p443 = pneg %p85
        %p444 = scmp.lt.s32.totalorder %s15, 1
        %s445 = scalar_select %p444, %s15, 1
        %s446 = scalar_lea.vmem %s3, %s445
        %p447 = pneg %p114
        %p448 = pneg %p111
        %p449 = pneg %p140
        %p450 = pneg %p137
        %p451 = scmp.lt.s32.totalorder %s15, 1
        %s452 = scalar_select %p451, %s15, 1
        %s453 = smul.addr %s452, 8
        %s454 = scalar_lea.vmem %s4, %s453
        %p455 = scmp.lt.s32.totalorder %s15, 1
        %s456 = scalar_select %p455, %s15, 1
        %s457 = scalar_lea.vmem %s3, %s456
        %p458 = scmp.lt.s32.totalorder %s15, 1
        %s459 = scalar_select %p458, %s15, 1
        %s460 = smul.addr %s459, 8
        %s461 = scalar_lea.vmem %s4, %s460
        %v462 = vld [vmem:[%s408] sm:$0x3]
        %v463 = vld [vmem:[%s408 + $0x2] sm:$0x3]
        %v464 = vld [vmem:[%s408 + $0x4] sm:$0x3]
        %v465 = vld [vmem:[%s408 + $0x6] sm:$0x3]
        %v466 = vld [vmem:[%s408 + $0x8] sm:$0x3]
        %v467 = vld [vmem:[%s408 + $0xa] sm:$0x3]
        %v468 = vld [vmem:[%s408 + $0xc] sm:$0x3]
        %v469 = vld [vmem:[%s408 + $0xe] sm:$0x3]
        %v470 = vld [vmem:[%s415] sm:$0x3]
        %v471 = vld [vmem:[%s415 + $0x2] sm:$0x3]
        %v472 = vld [vmem:[%s415 + $0x4] sm:$0x3]
        %v473 = vld [vmem:[%s415 + $0x6] sm:$0x3]
        %v474 = vld [vmem:[%s415 + $0x8] sm:$0x3]
        %v475 = vld [vmem:[%s415 + $0xa] sm:$0x3]
        %v476 = vld [vmem:[%s415 + $0xc] sm:$0x3]
        %v477 = vld [vmem:[%s415 + $0xe] sm:$0x3]
        %v478 = vld [vmem:[%s422] sm:$0x3]
        %v479 = vld [vmem:[%s422 + $0x2] sm:$0x3]
        %v480 = vld [vmem:[%s422 + $0x4] sm:$0x3]
        %v481 = vld [vmem:[%s422 + $0x6] sm:$0x3]
        %v482 = vld [vmem:[%s422 + $0x8] sm:$0x3]
        %v483 = vld [vmem:[%s422 + $0xa] sm:$0x3]
        %v484 = vld [vmem:[%s422 + $0xc] sm:$0x3]
        %v485 = vld [vmem:[%s422 + $0xe] sm:$0x3]
        %v486 = vld [vmem:[%s457] sm:$0x1]
        %v487 = vsub.f32 1.0, %v486
        %v488 = vmul.f32 %v487, -10000.0
        %v489 = vlaneseq
        %v490 = vshrl.u32 %v489, 7
        %v491 = vlaneseq
        %v492 = vand.u32 %v491, 127
        %vm493 = vcmp.le.s32.totalorder %v492, %v490
        %v502 = vrot.slane %v463, 7
        %vm503 = vcmask 1041409
        %v504 = vsel %vm503, %v502, %v462
        %v505 = vrot.slane %v464, 6
        %vm506 = vcmask 1042434
        %v507 = vsel %vm506, %v505, %v504
        %v508 = vrot.slane %v465, 5
        %vm509 = vcmask 1043459
        %v510 = vsel %vm509, %v508, %v507
        %v511 = vrot.slane %v466, 4
        %vm512 = vcmask 1044484
        %v513 = vsel %vm512, %v511, %v510
        %v514 = vrot.slane %v467, 3
        %vm515 = vcmask 1045509
        %v516 = vsel %vm515, %v514, %v513
        %v517 = vrot.slane %v468, 2
        %vm518 = vcmask 1046534
        %v519 = vsel %vm518, %v517, %v516
        %v520 = vrot.slane %v469, 1
        %vm521 = vcmask 1047559
        %v522 = vsel %vm521, %v520, %v519
        %v531 = vrot.slane %v471, 7
        %v532 = vsel %vm503, %v531, %v470
        %v533 = vrot.slane %v472, 6
        %v534 = vsel %vm506, %v533, %v532
        %v535 = vrot.slane %v473, 5
        %v536 = vsel %vm509, %v535, %v534
        %v537 = vrot.slane %v474, 4
        %v538 = vsel %vm512, %v537, %v536
        %v539 = vrot.slane %v475, 3
        %v540 = vsel %vm515, %v539, %v538
        %v541 = vrot.slane %v476, 2
        %v542 = vsel %vm518, %v541, %v540
        %v543 = vrot.slane %v477, 1
        %v544 = vsel %vm521, %v543, %v542
        %vm545 = vcmask 130048
        %v546 = vsel %vm545, %v522, 0
        %v548 = vsel %vm545, %v544, 0
        %550 = vmatprep.subr.mxu0 0.0
        %551 = vmatpush1.xpose.msra.mxu0 %v548
        %552 = vmatprep.subr.mxu0 0.0
        %553 = vmatpush1.xpose.msra.mxu0 0.0
        %554 = vmatprep.subr.mxu0 0.0
        %555 = vmatpush1.xpose.msra.mxu0 0.0
        %556 = vmatprep.subr.mxu0 0.0
        %557 = vmatpush1.xpose.msra.mxu0 0.0
        %558 = vmatprep.subr.mxu0 0.0
        %559 = vmatpush1.xpose.msra.mxu0 0.0
        %560 = vmatprep.subr.mxu0 0.0
        %561 = vmatpush1.xpose.msra.mxu0 0.0
        %562 = vmatprep.subr.mxu0 0.0
        %563 = vmatpush1.xpose.msra.mxu0 0.0
        %564 = vmatprep.subr.mxu0 0.0
        %565 = vmatpush1.xpose.msra.mxu0 0.0
        %566 = vmatprep.subr.mxu0 0.0
        %567 = vmatpush1.xpose.msra.mxu0 0.0
        %568 = vmatprep.subr.mxu0 0.0
        %569 = vmatpush1.xpose.msra.mxu0 0.0
        %570 = vmatprep.subr.mxu0 0.0
        %571 = vmatpush1.xpose.msra.mxu0 0.0
        %572 = vmatprep.subr.mxu0 0.0
        %573 = vmatpush1.xpose.msra.mxu0 0.0
        %574 = vmatprep.subr.mxu0 0.0
        %575 = vmatpush1.xpose.msra.mxu0 0.0
        %576 = vmatprep.subr.mxu0 0.0
        %577 = vmatpush1.xpose.msra.mxu0 0.0
        %578 = vmatprep.subr.mxu0 0.0
        %579 = vmatpush1.xpose.msra.mxu0 0.0
        %580 = vmatprep.subr.mxu0 0.0
        %581 = vmatpush1.xpose.msra.mxu0 0.0
        %582 = vmatprep.subr.mxu0 0.0
        %583 = vmatpush1.xpose.msra.mxu0 0.0
        %584 = vmatprep.subr.mxu0 0.0
        %585 = vmatpush1.xpose.msra.mxu0 0.0
        %586 = vmatprep.subr.mxu0 0.0
        %587 = vmatpush1.xpose.msra.mxu0 0.0
        %588 = vmatprep.subr.mxu0 0.0
        %589 = vmatpush1.xpose.msra.mxu0 0.0
        %590 = vmatprep.subr.mxu0 0.0
        %591 = vmatpush1.xpose.msra.mxu0 0.0
        %592 = vmatprep.subr.mxu0 0.0
        %593 = vmatpush1.xpose.msra.mxu0 0.0
        %594 = vmatprep.subr.mxu0 0.0
        %595 = vmatpush1.xpose.msra.mxu0 0.0
        %596 = vmatprep.subr.mxu0 0.0
        %597 = vmatpush1.xpose.msra.mxu0 0.0
        %598 = vmatprep.subr.mxu0 0.0
        %599 = vmatpush1.xpose.msra.mxu0 0.0
        %600 = vmatprep.subr.mxu0 0.0
        %601 = vmatpush1.xpose.msra.mxu0 0.0
        %602 = vmatprep.subr.mxu0 0.0
        %603 = vmatpush1.xpose.msra.mxu0 0.0
        %604 = vmatprep.subr.mxu0 0.0
        %605 = vmatpush1.xpose.msra.mxu0 0.0
        %606 = vmatprep.subr.mxu0 0.0
        %607 = vmatpush1.xpose.msra.mxu0 0.0
        %608 = vmatprep.subr.mxu0 0.0
        %609 = vmatpush1.xpose.msra.mxu0 0.0
        %610 = vmatprep.subr.mxu0 0.0
        %611 = vmatpush1.xpose.msra.mxu0 0.0
        %612 = vmatprep.subr.mxu0 0.0
        %613 = vmatpush1.xpose.msra.mxu0 0.0
        %614 = vmatprep.mubr.f32.mxu0 0.0
        %615 = vmatmul.mubr.f32.gmra.mrb[0].mxu0 %v546
        %v616 = vpop.f32.mrb[0].mxu0
        %v617 = vadd.f32 0.0, %v616
        %v618 = vpop.f32.mrb[0].mxu0
        %619 = vdwg.mxu0
        %v620 = vmul.f32 %v617, 0.25
        %v622 = vlaneseq
        %v623 = vshrl.u32 %v622, 7
        %v624 = vsub.s32 0, %v623
        %v625 = vrot.slane %v488, %v624
        %v627 = vadd.f32 %v620, %v625
        %v628 = vsel %vm493, %v627, -1e+09
        %vm629 = vcmask 64512
        %v630 = vsel %vm629, %v628, -inf
        %631 = vmax.xlane.f32.xlu0 %v630
        %v632 = vpop.xlane.xlu0 %631
        %v633 = vsub.f32 %v628, %v632
        %v634 = vmul.f32 %v633, 1.442695
        %v635 = vpow.pop %v634
        %v636 = vsel %vm629, %v635, 0.0
        %637 = vadd.xlane.f32.xlu0 %v636
        %v638 = vpop.xlane.xlu0 %637
        %v639 = vrcp.pop %v638
        %v640 = vmul.f32 %v635, %v639
        %v649 = vrot.slane %v479, 7
        %v650 = vsel %vm503, %v649, %v478
        %v651 = vrot.slane %v480, 6
        %v652 = vsel %vm506, %v651, %v650
        %v653 = vrot.slane %v481, 5
        %v654 = vsel %vm509, %v653, %v652
        %v655 = vrot.slane %v482, 4
        %v656 = vsel %vm512, %v655, %v654
        %v657 = vrot.slane %v483, 3
        %v658 = vsel %vm515, %v657, %v656
        %v659 = vrot.slane %v484, 2
        %v660 = vsel %vm518, %v659, %v658
        %v661 = vrot.slane %v485, 1
        %v662 = vsel %vm521, %v661, %v660
        %v665 = vsel %vm629, %v640, 0
        %667 = vmatprep.subr.mxu0 0.0
        %668 = vmatpush1.msra.mxu0 %v662
        %669 = vmatprep.subr.mxu0 0.0
        %670 = vmatpush1.msra.mxu0 0.0
        %671 = vmatprep.subr.mxu0 0.0
        %672 = vmatpush1.msra.mxu0 0.0
        %673 = vmatprep.subr.mxu0 0.0
        %674 = vmatpush1.msra.mxu0 0.0
        %675 = vmatprep.subr.mxu0 0.0
        %676 = vmatpush1.msra.mxu0 0.0
        %677 = vmatprep.subr.mxu0 0.0
        %678 = vmatpush1.msra.mxu0 0.0
        %679 = vmatprep.subr.mxu0 0.0
        %680 = vmatpush1.msra.mxu0 0.0
        %681 = vmatprep.subr.mxu0 0.0
        %682 = vmatpush1.msra.mxu0 0.0
        %683 = vmatprep.subr.mxu0 0.0
        %684 = vmatpush1.msra.mxu0 0.0
        %685 = vmatprep.subr.mxu0 0.0
        %686 = vmatpush1.msra.mxu0 0.0
        %687 = vmatprep.subr.mxu0 0.0
        %688 = vmatpush1.msra.mxu0 0.0
        %689 = vmatprep.subr.mxu0 0.0
        %690 = vmatpush1.msra.mxu0 0.0
        %691 = vmatprep.subr.mxu0 0.0
        %692 = vmatpush1.msra.mxu0 0.0
        %693 = vmatprep.subr.mxu0 0.0
        %694 = vmatpush1.msra.mxu0 0.0
        %695 = vmatprep.subr.mxu0 0.0
        %696 = vmatpush1.msra.mxu0 0.0
        %697 = vmatprep.subr.mxu0 0.0
        %698 = vmatpush1.msra.mxu0 0.0
        %699 = vmatprep.subr.mxu0 0.0
        %700 = vmatpush1.msra.mxu0 0.0
        %701 = vmatprep.subr.mxu0 0.0
        %702 = vmatpush1.msra.mxu0 0.0
        %703 = vmatprep.subr.mxu0 0.0
        %704 = vmatpush1.msra.mxu0 0.0
        %705 = vmatprep.subr.mxu0 0.0
        %706 = vmatpush1.msra.mxu0 0.0
        %707 = vmatprep.subr.mxu0 0.0
        %708 = vmatpush1.msra.mxu0 0.0
        %709 = vmatprep.subr.mxu0 0.0
        %710 = vmatpush1.msra.mxu0 0.0
        %711 = vmatprep.subr.mxu0 0.0
        %712 = vmatpush1.msra.mxu0 0.0
        %713 = vmatprep.subr.mxu0 0.0
        %714 = vmatpush1.msra.mxu0 0.0
        %715 = vmatprep.subr.mxu0 0.0
        %716 = vmatpush1.msra.mxu0 0.0
        %717 = vmatprep.subr.mxu0 0.0
        %718 = vmatpush1.msra.mxu0 0.0
        %719 = vmatprep.subr.mxu0 0.0
        %720 = vmatpush1.msra.mxu0 0.0
        %721 = vmatprep.subr.mxu0 0.0
        %722 = vmatpush1.msra.mxu0 0.0
        %723 = vmatprep.subr.mxu0 0.0
        %724 = vmatpush1.msra.mxu0 0.0
        %725 = vmatprep.subr.mxu0 0.0
        %726 = vmatpush1.msra.mxu0 0.0
        %727 = vmatprep.subr.mxu0 0.0
        %728 = vmatpush1.msra.mxu0 0.0
        %729 = vmatprep.subr.mxu0 0.0
        %730 = vmatpush1.msra.mxu0 0.0
        %731 = vmatprep.mubr.f32.mxu0 0.0
        %732 = vmatmul.mubr.f32.gmra.mrb[0].mxu0 %v665
        %v733 = vpop.f32.mrb[0].mxu0
        %v734 = vadd.f32 0.0, %v733
        %v735 = vpop.f32.mrb[0].mxu0
        %736 = vdwg.mxu0
        %737 = vst.msk [vmem:[%s461] sm:$0xff] %vm545, %v734
        %v738 = vrot.slane %v462, 1
        %v739 = vsel %vm503, %v463, %v738
        %v740 = vrot.slane %v464, 7
        %v741 = vsel %vm506, %v740, %v739
        %v742 = vrot.slane %v465, 6
        %v743 = vsel %vm509, %v742, %v741
        %v744 = vrot.slane %v466, 5
        %v745 = vsel %vm512, %v744, %v743
        %v746 = vrot.slane %v467, 4
        %v747 = vsel %vm515, %v746, %v745
        %v748 = vrot.slane %v468, 3
        %v749 = vsel %vm518, %v748, %v747
        %v750 = vrot.slane %v469, 2
        %v751 = vsel %vm521, %v750, %v749
        %v752 = vrot.slane %v470, 1
        %v753 = vsel %vm503, %v471, %v752
        %v754 = vrot.slane %v472, 7
        %v755 = vsel %vm506, %v754, %v753
        %v756 = vrot.slane %v473, 6
        %v757 = vsel %vm509, %v756, %v755
        %v758 = vrot.slane %v474, 5
        %v759 = vsel %vm512, %v758, %v757
        %v760 = vrot.slane %v475, 4
        %v761 = vsel %vm515, %v760, %v759
        %v762 = vrot.slane %v476, 3
        %v763 = vsel %vm518, %v762, %v761
        %v764 = vrot.slane %v477, 2
        %v765 = vsel %vm521, %v764, %v763
        %v766 = vsel %vm545, %v751, 0
        %v768 = vsel %vm545, %v765, 0
        %770 = vmatprep.subr.mxu0 0.0
        %771 = vmatpush1.xpose.msra.mxu0 %v768
        %772 = vmatprep.subr.mxu0 0.0
        %773 = vmatpush1.xpose.msra.mxu0 0.0
        %774 = vmatprep.subr.mxu0 0.0
        %775 = vmatpush1.xpose.msra.mxu0 0.0
        %776 = vmatprep.subr.mxu0 0.0
        %777 = vmatpush1.xpose.msra.mxu0 0.0
        %778 = vmatprep.subr.mxu0 0.0
        %779 = vmatpush1.xpose.msra.mxu0 0.0
        %780 = vmatprep.subr.mxu0 0.0
        %781 = vmatpush1.xpose.msra.mxu0 0.0
        %782 = vmatprep.subr.mxu0 0.0
        %783 = vmatpush1.xpose.msra.mxu0 0.0
        %784 = vmatprep.subr.mxu0 0.0
        %785 = vmatpush1.xpose.msra.mxu0 0.0
        %786 = vmatprep.subr.mxu0 0.0
        %787 = vmatpush1.xpose.msra.mxu0 0.0
        %788 = vmatprep.subr.mxu0 0.0
        %789 = vmatpush1.xpose.msra.mxu0 0.0
        %790 = vmatprep.subr.mxu0 0.0
        %791 = vmatpush1.xpose.msra.mxu0 0.0
        %792 = vmatprep.subr.mxu0 0.0
        %793 = vmatpush1.xpose.msra.mxu0 0.0
        %794 = vmatprep.subr.mxu0 0.0
        %795 = vmatpush1.xpose.msra.mxu0 0.0
        %796 = vmatprep.subr.mxu0 0.0
        %797 = vmatpush1.xpose.msra.mxu0 0.0
        %798 = vmatprep.subr.mxu0 0.0
        %799 = vmatpush1.xpose.msra.mxu0 0.0
        %800 = vmatprep.subr.mxu0 0.0
        %801 = vmatpush1.xpose.msra.mxu0 0.0
        %802 = vmatprep.subr.mxu0 0.0
        %803 = vmatpush1.xpose.msra.mxu0 0.0
        %804 = vmatprep.subr.mxu0 0.0
        %805 = vmatpush1.xpose.msra.mxu0 0.0
        %806 = vmatprep.subr.mxu0 0.0
        %807 = vmatpush1.xpose.msra.mxu0 0.0
        %808 = vmatprep.subr.mxu0 0.0
        %809 = vmatpush1.xpose.msra.mxu0 0.0
        %810 = vmatprep.subr.mxu0 0.0
        %811 = vmatpush1.xpose.msra.mxu0 0.0
        %812 = vmatprep.subr.mxu0 0.0
        %813 = vmatpush1.xpose.msra.mxu0 0.0
        %814 = vmatprep.subr.mxu0 0.0
        %815 = vmatpush1.xpose.msra.mxu0 0.0
        %816 = vmatprep.subr.mxu0 0.0
        %817 = vmatpush1.xpose.msra.mxu0 0.0
        %818 = vmatprep.subr.mxu0 0.0
        %819 = vmatpush1.xpose.msra.mxu0 0.0
        %820 = vmatprep.subr.mxu0 0.0
        %821 = vmatpush1.xpose.msra.mxu0 0.0
        %822 = vmatprep.subr.mxu0 0.0
        %823 = vmatpush1.xpose.msra.mxu0 0.0
        %824 = vmatprep.subr.mxu0 0.0
        %825 = vmatpush1.xpose.msra.mxu0 0.0
        %826 = vmatprep.subr.mxu0 0.0
        %827 = vmatpush1.xpose.msra.mxu0 0.0
        %828 = vmatprep.subr.mxu0 0.0
        %829 = vmatpush1.xpose.msra.mxu0 0.0
        %830 = vmatprep.subr.mxu0 0.0
        %831 = vmatpush1.xpose.msra.mxu0 0.0
        %832 = vmatprep.subr.mxu0 0.0
        %833 = vmatpush1.xpose.msra.mxu0 0.0
        %834 = vmatprep.mubr.f32.mxu0 0.0
        %835 = vmatmul.mubr.f32.gmra.mrb[0].mxu0 %v766
        %v836 = vpop.f32.mrb[0].mxu0
        %v837 = vadd.f32 0.0, %v836
        %v838 = vpop.f32.mrb[0].mxu0
        %839 = vdwg.mxu0
        %v840 = vmul.f32 %v837, 0.25
        %v841 = vadd.f32 %v840, %v625
        %v842 = vsel %vm493, %v841, -1e+09
        %v843 = vsel %vm629, %v842, -inf
        %844 = vmax.xlane.f32.xlu0 %v843
        %v845 = vpop.xlane.xlu0 %844
        %v846 = vsub.f32 %v842, %v845
        %v847 = vmul.f32 %v846, 1.442695
        %v848 = vpow.pop %v847
        %v849 = vsel %vm629, %v848, 0.0
        %850 = vadd.xlane.f32.xlu0 %v849
        %v851 = vpop.xlane.xlu0 %850
        %v852 = vrcp.pop %v851
        %v853 = vmul.f32 %v848, %v852
        %v854 = vrot.slane %v478, 1
        %v855 = vsel %vm503, %v479, %v854
        %v856 = vrot.slane %v480, 7
        %v857 = vsel %vm506, %v856, %v855
        %v858 = vrot.slane %v481, 6
        %v859 = vsel %vm509, %v858, %v857
        %v860 = vrot.slane %v482, 5
        %v861 = vsel %vm512, %v860, %v859
        %v862 = vrot.slane %v483, 4
        %v863 = vsel %vm515, %v862, %v861
        %v864 = vrot.slane %v484, 3
        %v865 = vsel %vm518, %v864, %v863
        %v866 = vrot.slane %v485, 2
        %v867 = vsel %vm521, %v866, %v865
        %v870 = vsel %vm629, %v853, 0
        %872 = vmatprep.subr.mxu0 0.0
        %873 = vmatpush1.msra.mxu0 %v867
        %874 = vmatprep.subr.mxu0 0.0
        %875 = vmatpush1.msra.mxu0 0.0
        %876 = vmatprep.subr.mxu0 0.0
        %877 = vmatpush1.msra.mxu0 0.0
        %878 = vmatprep.subr.mxu0 0.0
        %879 = vmatpush1.msra.mxu0 0.0
        %880 = vmatprep.subr.mxu0 0.0
        %881 = vmatpush1.msra.mxu0 0.0
        %882 = vmatprep.subr.mxu0 0.0
        %883 = vmatpush1.msra.mxu0 0.0
        %884 = vmatprep.subr.mxu0 0.0
        %885 = vmatpush1.msra.mxu0 0.0
        %886 = vmatprep.subr.mxu0 0.0
        %887 = vmatpush1.msra.mxu0 0.0
        %888 = vmatprep.subr.mxu0 0.0
        %889 = vmatpush1.msra.mxu0 0.0
        %890 = vmatprep.subr.mxu0 0.0
        %891 = vmatpush1.msra.mxu0 0.0
        %892 = vmatprep.subr.mxu0 0.0
        %893 = vmatpush1.msra.mxu0 0.0
        %894 = vmatprep.subr.mxu0 0.0
        %895 = vmatpush1.msra.mxu0 0.0
        %896 = vmatprep.subr.mxu0 0.0
        %897 = vmatpush1.msra.mxu0 0.0
        %898 = vmatprep.subr.mxu0 0.0
        %899 = vmatpush1.msra.mxu0 0.0
        %900 = vmatprep.subr.mxu0 0.0
        %901 = vmatpush1.msra.mxu0 0.0
        %902 = vmatprep.subr.mxu0 0.0
        %903 = vmatpush1.msra.mxu0 0.0
        %904 = vmatprep.subr.mxu0 0.0
        %905 = vmatpush1.msra.mxu0 0.0
        %906 = vmatprep.subr.mxu0 0.0
        %907 = vmatpush1.msra.mxu0 0.0
        %908 = vmatprep.subr.mxu0 0.0
        %909 = vmatpush1.msra.mxu0 0.0
        %910 = vmatprep.subr.mxu0 0.0
        %911 = vmatpush1.msra.mxu0 0.0
        %912 = vmatprep.subr.mxu0 0.0
        %913 = vmatpush1.msra.mxu0 0.0
        %914 = vmatprep.subr.mxu0 0.0
        %915 = vmatpush1.msra.mxu0 0.0
        %916 = vmatprep.subr.mxu0 0.0
        %917 = vmatpush1.msra.mxu0 0.0
        %918 = vmatprep.subr.mxu0 0.0
        %919 = vmatpush1.msra.mxu0 0.0
        %920 = vmatprep.subr.mxu0 0.0
        %921 = vmatpush1.msra.mxu0 0.0
        %922 = vmatprep.subr.mxu0 0.0
        %923 = vmatpush1.msra.mxu0 0.0
        %924 = vmatprep.subr.mxu0 0.0
        %925 = vmatpush1.msra.mxu0 0.0
        %926 = vmatprep.subr.mxu0 0.0
        %927 = vmatpush1.msra.mxu0 0.0
        %928 = vmatprep.subr.mxu0 0.0
        %929 = vmatpush1.msra.mxu0 0.0
        %930 = vmatprep.subr.mxu0 0.0
        %931 = vmatpush1.msra.mxu0 0.0
        %932 = vmatprep.subr.mxu0 0.0
        %933 = vmatpush1.msra.mxu0 0.0
        %934 = vmatprep.subr.mxu0 0.0
        %935 = vmatpush1.msra.mxu0 0.0
        %936 = vmatprep.mubr.f32.mxu0 0.0
        %937 = vmatmul.mubr.f32.gmra.mrb[0].mxu0 %v870
        %v938 = vpop.f32.mrb[0].mxu0
        %v939 = vadd.f32 0.0, %v938
        %v940 = vpop.f32.mrb[0].mxu0
        %941 = vdwg.mxu0
        %943 = vrot.lane.b32.xlu0 %v939, 16
        %v944 = vpop.permute.xlu0 %943
        %vm946 = vcmask 261248
        %947 = vst.msk [vmem:[%s461] sm:$0xff] %vm946, %v944
        %p948 = scmp.lt.s32.totalorder %s15, 1
        %s949 = scalar_select %p948, %s15, 1
        %s950 = smul.addr %s949, 8
        %s951 = scalar_lea.vmem %s4, %s950
        // Predicated region
        $region160: #{sonnet_forward.18} parent=146 // pred_check
          %p952 = pneg %p137
        $region161: #{sonnet_forward.18} parent=146 // pred_check_branch
          %954 = sbr.rel (%p952) target = $region163
        $region162: #{sonnet_forward.18} parent=146 // pred_region
          _
        $region163: #{sonnet_forward.18} parent=146 // pred_fallthru
          _
      $region147: #{sonnet_forward.18} parent=5 // pred_fallthru
        _
      %p955 = scmp.le.s32.totalorder 2, %s10
      // Predicated region
      $region164: #{sonnet_forward.18} parent=5 // pred_check
        %p956 = pneg %p955
      $region165: #{sonnet_forward.18} parent=5 // pred_check_branch
        %958 = sbr.rel (%p956) target = $region167
      $region166: #{sonnet_forward.18} parent=5 // pred_region
        %s959 = ssub.s32 %s10, 2
        // Predicated region
        $region168: #{sonnet_forward.18} parent=166 // pred_check
          %p960 = pneg %p143
        $region169: #{sonnet_forward.18} parent=166 // pred_check_branch
          %962 = sbr.rel (%p960) target = $region171
        $region170: #{sonnet_forward.18} parent=166 // pred_region
          %p963 = scmp.lt.s32.totalorder %s16, 1
          %s964 = scalar_select %p963, %s16, 1
          %s965 = smul.addr %s964, 8
          %s966 = scalar_lea.vmem %s4, %s965
        $region171: #{sonnet_forward.18} parent=166 // pred_fallthru
          _
      $region167: #{sonnet_forward.18} parent=5 // pred_fallthru
        _
    $region6: #{sonnet_forward.18} parent=1 // loop_footer
      %s14 = sadd.s32 1, %s10
    $region7: #{sonnet_forward.18} parent=1 // loop_footer_branch
      %9 = sbr.rel target = $region3
    $region8: #{sonnet_forward.18} parent=1 // loop_exit
      _

// kernel: sonnet_forward.21
$region0: #{sonnet_forward.21}
  #allocation0 [shape = 'u32[]', space=smem, size = 0x4, offset = 0x4, fixed_abs, tag = 'smem constant byte address 0x4 - core index']
  #allocation1 [shape = 'u32[144,128]{1,0:T(1,128)}', space=vmem, size = 0x12000, scoped, tag = 'internal scratch']
  #allocation2 [shape = 'f32[16,128]{1,0:T(8,128)}', space=vmem, size = 0x2000, scoped, tag = 'scratch operand']
  %s0 = inlined_call_operand.vmem [shape: f32[16,32], index: 0, kind: input, shape index: {}]
  %s1 = inlined_call_operand.vmem [shape: f32[32,128], index: 1, kind: input, shape index: {}]
  %s2 = inlined_call_operand.vmem [shape: f32[1,128], index: 2, kind: input, shape index: {}]
  %s3 = inlined_call_operand.vmem [shape: f32[16,128], index: 3, kind: output, shape index: {}]
  %s4 = sld [smem:[#allocation0]]
  $region30: #{sonnet_forward.21} parent=0
    _
  %s6 = ssub.s32 1, %s4
  %s7 = scalar_select 0, %s6, %s4
  // Predicated region
  $region2: #{sonnet_forward.21} parent=0 // pred_check
    _
  $region3: #{sonnet_forward.21} parent=0 // pred_check_branch
    %9 = sbr.rel (0) target = $region5
  $region4: #{sonnet_forward.21} parent=0 // pred_region
    _
  $region5: #{sonnet_forward.21} parent=0 // pred_fallthru
    _
  // Predicated region
  $region6: #{sonnet_forward.21} parent=0 // pred_check
    _
  $region7: #{sonnet_forward.21} parent=0 // pred_check_branch
    %11 = sbr.rel (0) target = $region9
  $region8: #{sonnet_forward.21} parent=0 // pred_region
    _
  $region9: #{sonnet_forward.21} parent=0 // pred_fallthru
    _
  // Predicated region
  $region10: #{sonnet_forward.21} parent=0 // pred_check
    _
  $region11: #{sonnet_forward.21} parent=0 // pred_check_branch
    %13 = sbr.rel (0) target = $region13
  $region12: #{sonnet_forward.21} parent=0 // pred_region
    _
  $region13: #{sonnet_forward.21} parent=0 // pred_fallthru
    _
  %p14 = scmp.eq.s32.totalorder 0, 0
  // Predicated region
  $region14: #{sonnet_forward.21} parent=0 // pred_check
    %p15 = pneg %p14
  $region15: #{sonnet_forward.21} parent=0 // pred_check_branch
    %17 = sbr.rel (%p15) target = $region17
  $region16: #{sonnet_forward.21} parent=0 // pred_region
    %18 = vst [vmem:[#allocation2] sm:$0xff] 0.0
    %19 = vst [vmem:[#allocation2 + $0x8] sm:$0xff] 0.0
  $region17: #{sonnet_forward.21} parent=0 // pred_fallthru
    _
  %v20 = vld [vmem:[#allocation2] sm:$0xff]
  %v21 = vld [vmem:[#allocation2 + $0x8] sm:$0xff]
  %v22 = vld [vmem:[%s0] sm:$0xff]
  %v23 = vld [vmem:[%s0 + $0x8] sm:$0xff]
  %v24 = vld [vmem:[%s1] sm:$0xff]
  %v25 = vld [vmem:[%s1 + $0x8] sm:$0xff]
  %v26 = vld [vmem:[%s1 + $0x10] sm:$0xff]
  %v27 = vld [vmem:[%s1 + $0x18] sm:$0xff]
  %vm28 = vcmask 261120
  %v30 = vsel %vm28, %v22, 0
  %v33 = vsel %vm28, %v23, 0
  %35 = vmatprep.subr.mxu0 0.0
  %36 = vmatpush1.msra.mxu0 %v24
  %37 = vmatprep.subr.mxu0 0.0
  %38 = vmatpush1.msra.mxu0 %v25
  %39 = vmatprep.subr.mxu0 0.0
  %40 = vmatpush1.msra.mxu0 %v26
  %41 = vmatprep.subr.mxu0 0.0
  %42 = vmatpush1.msra.mxu0 %v27
  %43 = vmatprep.subr.mxu0 0.0
  %44 = vmatpush1.msra.mxu0 0.0
  %45 = vmatprep.subr.mxu0 0.0
  %46 = vmatpush1.msra.mxu0 0.0
  %47 = vmatprep.subr.mxu0 0.0
  %48 = vmatpush1.msra.mxu0 0.0
  %49 = vmatprep.subr.mxu0 0.0
  %50 = vmatpush1.msra.mxu0 0.0
  %51 = vmatprep.subr.mxu0 0.0
  %52 = vmatpush1.msra.mxu0 0.0
  %53 = vmatprep.subr.mxu0 0.0
  %54 = vmatpush1.msra.mxu0 0.0
  %55 = vmatprep.subr.mxu0 0.0
  %56 = vmatpush1.msra.mxu0 0.0
  %57 = vmatprep.subr.mxu0 0.0
  %58 = vmatpush1.msra.mxu0 0.0
  %59 = vmatprep.subr.mxu0 0.0
  %60 = vmatpush1.msra.mxu0 0.0
  %61 = vmatprep.subr.mxu0 0.0
  %62 = vmatpush1.msra.mxu0 0.0
  %63 = vmatprep.subr.mxu0 0.0
  %64 = vmatpush1.msra.mxu0 0.0
  %65 = vmatprep.subr.mxu0 0.0
  %66 = vmatpush1.msra.mxu0 0.0
  %67 = vmatprep.subr.mxu0 0.0
  %68 = vmatpush1.msra.mxu0 0.0
  %69 = vmatprep.subr.mxu0 0.0
  %70 = vmatpush1.msra.mxu0 0.0
  %71 = vmatprep.subr.mxu0 0.0
  %72 = vmatpush1.msra.mxu0 0.0
  %73 = vmatprep.subr.mxu0 0.0
  %74 = vmatpush1.msra.mxu0 0.0
  %75 = vmatprep.subr.mxu0 0.0
  %76 = vmatpush1.msra.mxu0 0.0
  %77 = vmatprep.subr.mxu0 0.0
  %78 = vmatpush1.msra.mxu0 0.0
  %79 = vmatprep.subr.mxu0 0.0
  %80 = vmatpush1.msra.mxu0 0.0
  %81 = vmatprep.subr.mxu0 0.0
  %82 = vmatpush1.msra.mxu0 0.0
  %83 = vmatprep.subr.mxu0 0.0
  %84 = vmatpush1.msra.mxu0 0.0
  %85 = vmatprep.subr.mxu0 0.0
  %86 = vmatpush1.msra.mxu0 0.0
  %87 = vmatprep.subr.mxu0 0.0
  %88 = vmatpush1.msra.mxu0 0.0
  %89 = vmatprep.subr.mxu0 0.0
  %90 = vmatpush1.msra.mxu0 0.0
  %91 = vmatprep.subr.mxu0 0.0
  %92 = vmatpush1.msra.mxu0 0.0
  %93 = vmatprep.subr.mxu0 0.0
  %94 = vmatpush1.msra.mxu0 0.0
  %95 = vmatprep.subr.mxu0 0.0
  %96 = vmatpush1.msra.mxu0 0.0
  %97 = vmatprep.subr.mxu0 0.0
  %98 = vmatpush1.msra.mxu0 0.0
  %99 = vmatprep.mubr.f32.mxu0 0.0
  %100 = vmatmul.mubr.f32.gmra.mrb[0].mxu0 %v30
  %v101 = vpop.f32.mrb[0].mxu0
  %v102 = vadd.f32 0.0, %v101
  %v103 = vpop.f32.mrb[0].mxu0
  %104 = vmatprep.mubr.f32.mxu0 0.0
  %105 = vmatmul.mubr.f32.gmra.mrb[0].mxu0 %v33
  %v106 = vpop.f32.mrb[0].mxu0
  %v107 = vadd.f32 0.0, %v106
  %v108 = vpop.f32.mrb[0].mxu0
  %109 = vdwg.mxu0
  %v110 = vadd.f32 %v20, %v102
  %v111 = vadd.f32 %v21, %v107
  %112 = vst [vmem:[#allocation2] sm:$0xff] %v110
  %113 = vst [vmem:[#allocation2 + $0x8] sm:$0xff] %v111
  // Predicated region
  $region18: #{sonnet_forward.21} parent=0 // pred_check
    %p114 = pneg %p14
  $region19: #{sonnet_forward.21} parent=0 // pred_check_branch
    %116 = sbr.rel (%p114) target = $region21
  $region20: #{sonnet_forward.21} parent=0 // pred_region
    %v117 = vld [vmem:[#allocation2] sm:$0xff]
    %v118 = vld [vmem:[#allocation2 + $0x8] sm:$0xff]
    %v119 = vld [vmem:[%s2] sm:$0x1]
    %v121 = vlaneseq
    %v122 = vshrl.u32 %v121, 7
    %v123 = vsub.s32 0, %v122
    %v124 = vrot.slane %v119, %v123
    %v126 = vadd.f32 %v117, %v124
    %v127 = vadd.f32 %v118, %v124
    %v128 = vmul.f32 %v126, %v126
    %v129 = vmul.f32 %v127, %v127
    %v130 = vmul.f32 %v126, %v128
    %v131 = vmul.f32 %v127, %v129
    %v132 = vmul.f32 %v130, 0.044715
    %v133 = vmul.f32 %v131, 0.044715
    %v134 = vadd.f32 %v126, %v132
    %v135 = vadd.f32 %v127, %v133
    %v136 = vmul.f32 %v134, 0.7978846
    %v137 = vmul.f32 %v135, 0.7978846
    %v138 = vtanh.pop %v136
    %v139 = vtanh.pop %v137
    %v140 = vadd.f32 %v138, 1.0
    %v141 = vadd.f32 %v139, 1.0
    %v142 = vmul.f32 %v140, 0.5
    %v143 = vmul.f32 %v141, 0.5
    %v144 = vmul.f32 %v126, %v142
    %v145 = vmul.f32 %v127, %v143
    %146 = vst [vmem:[%s3] sm:$0xff] %v144
    %147 = vst [vmem:[%s3 + $0x8] sm:$0xff] %v145
  $region21: #{sonnet_forward.21} parent=0 // pred_fallthru
    _
  // Predicated region
  $region22: #{sonnet_forward.21} parent=0 // pred_check
    _
  $region23: #{sonnet_forward.21} parent=0 // pred_check_branch
    %149 = sbr.rel (0) target = $region25
  $region24: #{sonnet_forward.21} parent=0 // pred_region
    _
  $region25: #{sonnet_forward.21} parent=0 // pred_fallthru
    _
  // Predicated region
  $region26: #{sonnet_forward.21} parent=0 // pred_check
    _
  $region27: #{sonnet_forward.21} parent=0 // pred_check_branch
    %151 = sbr.rel (0) target = $region29
  $region28: #{sonnet_forward.21} parent=0 // pred_region
    _
  $region29: #{sonnet_forward.21} parent=0 // pred_fallthru
    _

// kernel: sonnet_forward.22
$region0: #{sonnet_forward.22}
  #allocation0 [shape = 'u32[]', space=smem, size = 0x4, offset = 0x4, fixed_abs, tag = 'smem constant byte address 0x4 - core index']
  #allocation1 [shape = 'u32[144,128]{1,0:T(1,128)}', space=vmem, size = 0x12000, scoped, tag = 'internal scratch']
  #allocation2 [shape = 'f32[16,32]{1,0:T(8,128)}', space=vmem, size = 0x2000, scoped, tag = 'scratch operand']
  %s0 = inlined_call_operand.vmem [shape: f32[16,128], index: 0, kind: input, shape index: {}]
  %s1 = inlined_call_operand.vmem [shape: f32[128,32], index: 1, kind: input, shape index: {}]
  %s2 = inlined_call_operand.vmem [shape: f32[1,32], index: 2, kind: input, shape index: {}]
  %s3 = inlined_call_operand.vmem [shape: f32[16,32], index: 3, kind: input, shape index: {}]
  %s4 = inlined_call_operand.vmem [shape: f32[16,32], index: 4, kind: output, shape index: {}]
  %s5 = sld [smem:[#allocation0]]
  $region34: #{sonnet_forward.22} parent=0
    _
  %s7 = ssub.s32 1, %s5
  %s8 = scalar_select 0, %s7, %s5
  // Predicated region
  $region2: #{sonnet_forward.22} parent=0 // pred_check
    _
  $region3: #{sonnet_forward.22} parent=0 // pred_check_branch
    %10 = sbr.rel (0) target = $region5
  $region4: #{sonnet_forward.22} parent=0 // pred_region
    _
  $region5: #{sonnet_forward.22} parent=0 // pred_fallthru
    _
  // Predicated region
  $region6: #{sonnet_forward.22} parent=0 // pred_check
    _
  $region7: #{sonnet_forward.22} parent=0 // pred_check_branch
    %12 = sbr.rel (0) target = $region9
  $region8: #{sonnet_forward.22} parent=0 // pred_region
    _
  $region9: #{sonnet_forward.22} parent=0 // pred_fallthru
    _
  // Predicated region
  $region10: #{sonnet_forward.22} parent=0 // pred_check
    _
  $region11: #{sonnet_forward.22} parent=0 // pred_check_branch
    %14 = sbr.rel (0) target = $region13
  $region12: #{sonnet_forward.22} parent=0 // pred_region
    _
  $region13: #{sonnet_forward.22} parent=0 // pred_fallthru
    _
  // Predicated region
  $region14: #{sonnet_forward.22} parent=0 // pred_check
    _
  $region15: #{sonnet_forward.22} parent=0 // pred_check_branch
    %16 = sbr.rel (0) target = $region17
  $region16: #{sonnet_forward.22} parent=0 // pred_region
    _
  $region17: #{sonnet_forward.22} parent=0 // pred_fallthru
    _
  %p17 = scmp.eq.s32.totalorder 0, 0
  // Predicated region
  $region18: #{sonnet_forward.22} parent=0 // pred_check
    %p18 = pneg %p17
  $region19: #{sonnet_forward.22} parent=0 // pred_check_branch
    %20 = sbr.rel (%p18) target = $region21
  $region20: #{sonnet_forward.22} parent=0 // pred_region
    %vm21 = vcmask 261120
    %22 = vst.msk [vmem:[#allocation2] sm:$0xff] %vm21, 0.0
    %23 = vst.msk [vmem:[#allocation2 + $0x8] sm:$0xff] %vm21, 0.0
  $region21: #{sonnet_forward.22} parent=0 // pred_fallthru
    _
  %v24 = vld [vmem:[#allocation2] sm:$0xff]
  %v25 = vld [vmem:[#allocation2 + $0x8] sm:$0xff]
  %v26 = vld [vmem:[%s0] sm:$0xff]
  %v27 = vld [vmem:[%s0 + $0x8] sm:$0xff]
  %v28 = vld [vmem:[%s1] sm:$0xff]
  %v29 = vld [vmem:[%s1 + $0x8] sm:$0xff]
  %v30 = vld [vmem:[%s1 + $0x10] sm:$0xff]
  %v31 = vld [vmem:[%s1 + $0x18] sm:$0xff]
  %v32 = vld [vmem:[%s1 + $0x20] sm:$0xff]
  %v33 = vld [vmem:[%s1 + $0x28] sm:$0xff]
  %v34 = vld [vmem:[%s1 + $0x30] sm:$0xff]
  %v35 = vld [vmem:[%s1 + $0x38] sm:$0xff]
  %v36 = vld [vmem:[%s1 + $0x40] sm:$0xff]
  %v37 = vld [vmem:[%s1 + $0x48] sm:$0xff]
  %v38 = vld [vmem:[%s1 + $0x50] sm:$0xff]
  %v39 = vld [vmem:[%s1 + $0x58] sm:$0xff]
  %v40 = vld [vmem:[%s1 + $0x60] sm:$0xff]
  %v41 = vld [vmem:[%s1 + $0x68] sm:$0xff]
  %v42 = vld [vmem:[%s1 + $0x70] sm:$0xff]
  %v43 = vld [vmem:[%s1 + $0x78] sm:$0xff]
  %44 = vmatprep.subr.mxu0 0.0
  %45 = vmatpush1.msra.mxu0 %v28
  %46 = vmatprep.subr.mxu0 0.0
  %47 = vmatpush1.msra.mxu0 %v29
  %48 = vmatprep.subr.mxu0 0.0
  %49 = vmatpush1.msra.mxu0 %v30
  %50 = vmatprep.subr.mxu0 0.0
  %51 = vmatpush1.msra.mxu0 %v31
  %52 = vmatprep.subr.mxu0 0.0
  %53 = vmatpush1.msra.mxu0 %v32
  %54 = vmatprep.subr.mxu0 0.0
  %55 = vmatpush1.msra.mxu0 %v33
  %56 = vmatprep.subr.mxu0 0.0
  %57 = vmatpush1.msra.mxu0 %v34
  %58 = vmatprep.subr.mxu0 0.0
  %59 = vmatpush1.msra.mxu0 %v35
  %60 = vmatprep.subr.mxu0 0.0
  %61 = vmatpush1.msra.mxu0 %v36
  %62 = vmatprep.subr.mxu0 0.0
  %63 = vmatpush1.msra.mxu0 %v37
  %64 = vmatprep.subr.mxu0 0.0
  %65 = vmatpush1.msra.mxu0 %v38
  %66 = vmatprep.subr.mxu0 0.0
  %67 = vmatpush1.msra.mxu0 %v39
  %68 = vmatprep.subr.mxu0 0.0
  %69 = vmatpush1.msra.mxu0 %v40
  %70 = vmatprep.subr.mxu0 0.0
  %71 = vmatpush1.msra.mxu0 %v41
  %72 = vmatprep.subr.mxu0 0.0
  %73 = vmatpush1.msra.mxu0 %v42
  %74 = vmatprep.subr.mxu0 0.0
  %75 = vmatpush1.msra.mxu0 %v43
  %76 = vmatprep.subr.mxu0 0.0
  %77 = vmatpush1.msra.mxu0 0.0
  %78 = vmatprep.subr.mxu0 0.0
  %79 = vmatpush1.msra.mxu0 0.0
  %80 = vmatprep.subr.mxu0 0.0
  %81 = vmatpush1.msra.mxu0 0.0
  %82 = vmatprep.subr.mxu0 0.0
  %83 = vmatpush1.msra.mxu0 0.0
  %84 = vmatprep.subr.mxu0 0.0
  %85 = vmatpush1.msra.mxu0 0.0
  %86 = vmatprep.subr.mxu0 0.0
  %87 = vmatpush1.msra.mxu0 0.0
  %88 = vmatprep.subr.mxu0 0.0
  %89 = vmatpush1.msra.mxu0 0.0
  %90 = vmatprep.subr.mxu0 0.0
  %91 = vmatpush1.msra.mxu0 0.0
  %92 = vmatprep.subr.mxu0 0.0
  %93 = vmatpush1.msra.mxu0 0.0
  %94 = vmatprep.subr.mxu0 0.0
  %95 = vmatpush1.msra.mxu0 0.0
  %96 = vmatprep.subr.mxu0 0.0
  %97 = vmatpush1.msra.mxu0 0.0
  %98 = vmatprep.subr.mxu0 0.0
  %99 = vmatpush1.msra.mxu0 0.0
  %100 = vmatprep.subr.mxu0 0.0
  %101 = vmatpush1.msra.mxu0 0.0
  %102 = vmatprep.subr.mxu0 0.0
  %103 = vmatpush1.msra.mxu0 0.0
  %104 = vmatprep.subr.mxu0 0.0
  %105 = vmatpush1.msra.mxu0 0.0
  %106 = vmatprep.subr.mxu0 0.0
  %107 = vmatpush1.msra.mxu0 0.0
  %108 = vmatprep.mubr.f32.mxu0 0.0
  %109 = vmatmul.mubr.f32.gmra.mrb[0].mxu0 %v26
  %v110 = vpop.f32.mrb[0].mxu0
  %v111 = vadd.f32 0.0, %v110
  %v112 = vpop.f32.mrb[0].mxu0
  %113 = vmatprep.mubr.f32.mxu0 0.0
  %114 = vmatmul.mubr.f32.gmra.mrb[0].mxu0 %v27
  %v115 = vpop.f32.mrb[0].mxu0
  %v116 = vadd.f32 0.0, %v115
  %v117 = vpop.f32.mrb[0].mxu0
  %118 = vdwg.mxu0
  %v119 = vadd.f32 %v24, %v111
  %v120 = vadd.f32 %v25, %v116
  %vm121 = vcmask 261120
  %122 = vst.msk [vmem:[#allocation2] sm:$0xff] %vm121, %v119
  %123 = vst.msk [vmem:[#allocation2 + $0x8] sm:$0xff] %vm121, %v120
  // Predicated region
  $region22: #{sonnet_forward.22} parent=0 // pred_check
    %p124 = pneg %p17
  $region23: #{sonnet_forward.22} parent=0 // pred_check_branch
    %126 = sbr.rel (%p124) target = $region25
  $region24: #{sonnet_forward.22} parent=0 // pred_region
    %v127 = vld [vmem:[#allocation2] sm:$0xff]
    %v128 = vld [vmem:[#allocation2 + $0x8] sm:$0xff]
    %v129 = vld [vmem:[%s2] sm:$0x1]
    %v131 = vlaneseq
    %v132 = vshrl.u32 %v131, 7
    %v133 = vsub.s32 0, %v132
    %v134 = vrot.slane %v129, %v133
    %v136 = vadd.f32 %v127, %v134
    %v137 = vadd.f32 %v128, %v134
    %v138 = vld [vmem:[%s3] sm:$0xff]
    %v139 = vld [vmem:[%s3 + $0x8] sm:$0xff]
    %v140 = vadd.f32 %v136, %v138
    %v141 = vadd.f32 %v137, %v139
    %142 = vst.msk [vmem:[%s4] sm:$0xff] %vm121, %v140
    %143 = vst.msk [vmem:[%s4 + $0x8] sm:$0xff] %vm121, %v141
  $region25: #{sonnet_forward.22} parent=0 // pred_fallthru
    _
  // Predicated region
  $region26: #{sonnet_forward.22} parent=0 // pred_check
    _
  $region27: #{sonnet_forward.22} parent=0 // pred_check_branch
    %145 = sbr.rel (0) target = $region29
  $region28: #{sonnet_forward.22} parent=0 // pred_region
    _
  $region29: #{sonnet_forward.22} parent=0 // pred_fallthru
    _
  // Predicated region
  $region30: #{sonnet_forward.22} parent=0 // pred_check
    _
  $region31: #{sonnet_forward.22} parent=0 // pred_check_branch
    %147 = sbr.rel (0) target = $region33
  $region32: #{sonnet_forward.22} parent=0 // pred_region
    _
  $region33: #{sonnet_forward.22} parent=0 // pred_fallthru
    _

// kernel: sonnet_forward.31
$region0: #{sonnet_forward.31}
  #allocation0 [shape = 'u32[]', space=smem, size = 0x4, offset = 0x4, fixed_abs, tag = 'smem constant byte address 0x4 - core index']
  #allocation1 [shape = 'u32[144,128]{1,0:T(1,128)}', space=vmem, size = 0x12000, scoped, tag = 'internal scratch']
  #allocation2 [shape = 'f32[16,64]{1,0:T(8,128)}', space=vmem, size = 0x2000, scoped, tag = 'scratch operand']
  %s0 = inlined_call_operand.vmem [shape: f32[16,32], index: 0, kind: input, shape index: {}]
  %s1 = inlined_call_operand.vmem [shape: f32[64,32], index: 1, kind: input, shape index: {}]
  %s2 = inlined_call_operand.hbm [shape: f32[16,64], index: 2, kind: output, shape index: {}]
  %s3 = sld [smem:[#allocation0]]
  $region26: #{sonnet_forward.31} parent=0
    _
  %s5 = ssub.s32 1, %s3
  %s6 = scalar_select 0, %s5, %s3
  $region1: #{sonnet_forward.31} parent=0
    #allocation3 [shape = 'u8[8192]{0}', space=vmem, size = 0x2000, scoped, tag = 'output window, operand 0, single buffered']
    #allocation4 [shape = 's32[1]{0}', space=sflag, size = 0x4, scoped, tag = 'scoped memory for sonnet_forward.31']
    %7 = vsyncpa [#allocation4], 0
    // Predicated region
    $region2: #{sonnet_forward.31} parent=1 // pred_check
      _
    $region3: #{sonnet_forward.31} parent=1 // pred_check_branch
      %9 = sbr.rel (0) target = $region5
    $region4: #{sonnet_forward.31} parent=1 // pred_region
      _
    $region5: #{sonnet_forward.31} parent=1 // pred_fallthru
      _
    // Predicated region
    $region6: #{sonnet_forward.31} parent=1 // pred_check
      _
    $region7: #{sonnet_forward.31} parent=1 // pred_check_branch
      %11 = sbr.rel (0) target = $region9
    $region8: #{sonnet_forward.31} parent=1 // pred_region
      _
    $region9: #{sonnet_forward.31} parent=1 // pred_fallthru
      _
    %p12 = scmp.eq.s32.totalorder 0, 0
    // Predicated region
    $region10: #{sonnet_forward.31} parent=1 // pred_check
      %p13 = pneg %p12
    $region11: #{sonnet_forward.31} parent=1 // pred_check_branch
      %15 = sbr.rel (%p13) target = $region13
    $region12: #{sonnet_forward.31} parent=1 // pred_region
      %vm16 = vcmask 523264
      %17 = vst.msk [vmem:[#allocation2] sm:$0xff] %vm16, 0.0
      %18 = vst.msk [vmem:[#allocation2 + $0x8] sm:$0xff] %vm16, 0.0
    $region13: #{sonnet_forward.31} parent=1 // pred_fallthru
      _
    %v19 = vld [vmem:[#allocation2] sm:$0xff]
    %v20 = vld [vmem:[#allocation2 + $0x8] sm:$0xff]
    %v21 = vld [vmem:[%s0] sm:$0xff]
    %v22 = vld [vmem:[%s0 + $0x8] sm:$0xff]
    %v23 = vld [vmem:[%s1] sm:$0xff]
    %v24 = vld [vmem:[%s1 + $0x8] sm:$0xff]
    %v25 = vld [vmem:[%s1 + $0x10] sm:$0xff]
    %v26 = vld [vmem:[%s1 + $0x18] sm:$0xff]
    %v27 = vld [vmem:[%s1 + $0x20] sm:$0xff]
    %v28 = vld [vmem:[%s1 + $0x28] sm:$0xff]
    %v29 = vld [vmem:[%s1 + $0x30] sm:$0xff]
    %v30 = vld [vmem:[%s1 + $0x38] sm:$0xff]
    %vm31 = vcmask 261120
    %v33 = vsel %vm31, %v21, 0
    %v36 = vsel %vm31, %v22, 0
    %v39 = vsel %vm31, %v23, 0
    %v42 = vsel %vm31, %v24, 0
    %v45 = vsel %vm31, %v25, 0
    %v48 = vsel %vm31, %v26, 0
    %v51 = vsel %vm31, %v27, 0
    %v54 = vsel %vm31, %v28, 0
    %v57 = vsel %vm31, %v29, 0
    %v60 = vsel %vm31, %v30, 0
    %62 = vmatprep.subr.mxu0 0.0
    %63 = vmatpush1.xpose.msra.mxu0 %v39
    %64 = vmatprep.subr.mxu0 0.0
    %65 = vmatpush1.xpose.msra.mxu0 %v42
    %66 = vmatprep.subr.mxu0 0.0
    %67 = vmatpush1.xpose.msra.mxu0 %v45
    %68 = vmatprep.subr.mxu0 0.0
    %69 = vmatpush1.xpose.msra.mxu0 %v48
    %70 = vmatprep.subr.mxu0 0.0
    %71 = vmatpush1.xpose.msra.mxu0 %v51
    %72 = vmatprep.subr.mxu0 0.0
    %73 = vmatpush1.xpose.msra.mxu0 %v54
    %74 = vmatprep.subr.mxu0 0.0
    %75 = vmatpush1.xpose.msra.mxu0 %v57
    %76 = vmatprep.subr.mxu0 0.0
    %77 = vmatpush1.xpose.msra.mxu0 %v60
    %78 = vmatprep.subr.mxu0 0.0
    %79 = vmatpush1.xpose.msra.mxu0 0.0
    %80 = vmatprep.subr.mxu0 0.0
    %81 = vmatpush1.xpose.msra.mxu0 0.0
    %82 = vmatprep.subr.mxu0 0.0
    %83 = vmatpush1.xpose.msra.mxu0 0.0
    %84 = vmatprep.subr.mxu0 0.0
    %85 = vmatpush1.xpose.msra.mxu0 0.0
    %86 = vmatprep.subr.mxu0 0.0
    %87 = vmatpush1.xpose.msra.mxu0 0.0
    %88 = vmatprep.subr.mxu0 0.0
    %89 = vmatpush1.xpose.msra.mxu0 0.0
    %90 = vmatprep.subr.mxu0 0.0
    %91 = vmatpush1.xpose.msra.mxu0 0.0
    %92 = vmatprep.subr.mxu0 0.0
    %93 = vmatpush1.xpose.msra.mxu0 0.0
    %94 = vmatprep.subr.mxu0 0.0
    %95 = vmatpush1.xpose.msra.mxu0 0.0
    %96 = vmatprep.subr.mxu0 0.0
    %97 = vmatpush1.xpose.msra.mxu0 0.0
    %98 = vmatprep.subr.mxu0 0.0
    %99 = vmatpush1.xpose.msra.mxu0 0.0
    %100 = vmatprep.subr.mxu0 0.0
    %101 = vmatpush1.xpose.msra.mxu0 0.0
    %102 = vmatprep.subr.mxu0 0.0
    %103 = vmatpush1.xpose.msra.mxu0 0.0
    %104 = vmatprep.subr.mxu0 0.0
    %105 = vmatpush1.xpose.msra.mxu0 0.0
    %106 = vmatprep.subr.mxu0 0.0
    %107 = vmatpush1.xpose.msra.mxu0 0.0
    %108 = vmatprep.subr.mxu0 0.0
    %109 = vmatpush1.xpose.msra.mxu0 0.0
    %110 = vmatprep.subr.mxu0 0.0
    %111 = vmatpush1.xpose.msra.mxu0 0.0
    %112 = vmatprep.subr.mxu0 0.0
    %113 = vmatpush1.xpose.msra.mxu0 0.0
    %114 = vmatprep.subr.mxu0 0.0
    %115 = vmatpush1.xpose.msra.mxu0 0.0
    %116 = vmatprep.subr.mxu0 0.0
    %117 = vmatpush1.xpose.msra.mxu0 0.0
    %118 = vmatprep.subr.mxu0 0.0
    %119 = vmatpush1.xpose.msra.mxu0 0.0
    %120 = vmatprep.subr.mxu0 0.0
    %121 = vmatpush1.xpose.msra.mxu0 0.0
    %122 = vmatprep.subr.mxu0 0.0
    %123 = vmatpush1.xpose.msra.mxu0 0.0
    %124 = vmatprep.subr.mxu0 0.0
    %125 = vmatpush1.xpose.msra.mxu0 0.0
    %126 = vmatprep.mubr.f32.mxu0 0.0
    %127 = vmatmul.mubr.f32.gmra.mrb[0].mxu0 %v33
    %v128 = vpop.f32.mrb[0].mxu0
    %v129 = vadd.f32 0.0, %v128
    %v130 = vpop.f32.mrb[0].mxu0
    %131 = vmatprep.mubr.f32.mxu0 0.0
    %132 = vmatmul.mubr.f32.gmra.mrb[0].mxu0 %v36
    %v133 = vpop.f32.mrb[0].mxu0
    %v134 = vadd.f32 0.0, %v133
    %v135 = vpop.f32.mrb[0].mxu0
    %136 = vdwg.mxu0
    %v137 = vadd.f32 %v19, %v129
    %v138 = vadd.f32 %v20, %v134
    %vm139 = vcmask 523264
    %140 = vst.msk [vmem:[#allocation2] sm:$0xff] %vm139, %v137
    %141 = vst.msk [vmem:[#allocation2 + $0x8] sm:$0xff] %vm139, %v138
    // Predicated region
    $region14: #{sonnet_forward.31} parent=1 // pred_check
      %p142 = pneg %p12
    $region15: #{sonnet_forward.31} parent=1 // pred_check_branch
      %144 = sbr.rel (%p142) target = $region17
    $region16: #{sonnet_forward.31} parent=1 // pred_region
      %v145 = vld [vmem:[#allocation2] sm:$0xff]
      %v146 = vld [vmem:[#allocation2 + $0x8] sm:$0xff]
      %147 = vst.msk [vmem:[#allocation3] sm:$0xff] %vm139, %v145
      %148 = vst.msk [vmem:[#allocation3 + $0x8] sm:$0xff] %vm139, %v146
    $region17: #{sonnet_forward.31} parent=1 // pred_fallthru
      _
    // Predicated region
    $region18: #{sonnet_forward.31} parent=1 // pred_check
      _
    $region19: #{sonnet_forward.31} parent=1 // pred_check_branch
      %150 = sbr.rel (0) target = $region21
    $region20: #{sonnet_forward.31} parent=1 // pred_region
      %s152 = ssub.s32 256, 256
      %153 = vsyncadd [#allocation4], %s152
      %s154 = sshll.u32 [#allocation3], 4
      %s155 = int_to_ptr.vmem [resolvable:$true] %s154
      %160 = dma.vmem_to_hbm [thread:$0]  %s155, 256, %s2, [#allocation4], 128, 128, 8
    $region21: #{sonnet_forward.31} parent=1 // pred_fallthru
      _
    // Predicated region
    $region22: #{sonnet_forward.31} parent=1 // pred_check
      _
    $region23: #{sonnet_forward.31} parent=1 // pred_check_branch
      %162 = sbr.rel (0) target = $region25
    $region24: #{sonnet_forward.31} parent=1 // pred_region
      %163 = dma.done [#allocation4], 256
    $region25: #{sonnet_forward.31} parent=1 // pred_fallthru
      _
    %164 = vsyncpa [#allocation4], 1

</llo_original>
